<compile_context>
chip_gen: v7x
topology: tpu7x:2x2x1
jax: 0.10.0
libtpu: 0.0.40
codegen_flags: <defaults>
</compile_context>

<pallas_src>
import functools

import jax
import jax.numpy as jnp
from jax.experimental import pallas as pl
from jax.experimental.pallas import tpu as pltpu


HIDDEN = 512
LANE = 128          # lane width (output-class padding / tile granularity)
TB_MAX = 512        # max batch-tile rows (review: 512-1024; 512 fits every chip's default scoped VMEM)
NEG_INF = -1e30     # bias for padded output classes -> zero softmax probability


def _round_up(n, m):
    return ((n + m - 1) // m) * m


def _choose_tb(batch):
    """Batch tile: multiple of 128, capped at TB_MAX, >=2 grid steps when possible (v7x megacore)."""
    bp = _round_up(max(batch, 1), LANE)
    return min(TB_MAX, max(LANE, _round_up(bp // 2, LANE)))


def _mlp_softmax_kernel(x_ref, w1_ref, b1_ref, w2_ref, b2_ref, w3_ref, b3_ref,
                        o_ref):
    """Fused (Linear -> ReLU) x2 -> Linear -> softmax(axis=-1) on one batch tile."""
    x = x_ref[...].astype(jnp.bfloat16)                       # cast in-kernel, bf16 [TB, IN]

    # Linear 01 + ReLU   (dropout == identity at inference)
    h = jnp.dot(x, w1_ref[...], preferred_element_type=jnp.float32) + b1_ref[...]
    h = jnp.maximum(h, 0.0).astype(jnp.bfloat16)

    # Linear 02 + ReLU
    h = jnp.dot(h, w2_ref[...], preferred_element_type=jnp.float32) + b2_ref[...]
    h = jnp.maximum(h, 0.0).astype(jnp.bfloat16)

    # Linear 03 (padded output classes carry a -1e30 bias)
    logits = jnp.dot(h, w3_ref[...], preferred_element_type=jnp.float32) + b3_ref[...]

    # Numerically-stable softmax over the feature (lane) axis, f32, exact normalization.
    m = jnp.max(logits, axis=-1, keepdims=True)
    e = jnp.exp(logits - m)                                    # reuses logits' storage; no extra live f32 temp
    denom = jnp.sum(e, axis=-1, keepdims=True)
    o_ref[...] = (e / denom).astype(o_ref.dtype)


@functools.partial(jax.jit, static_argnames=("out_features",))
def unet_classifier_forward(x, packed, out_features):
    """x: [B, in_features] float32. packed: params from pack_params."""
    w1, b1 = packed["w1"], packed["b1"]    # bf16 [IN, H],    f32 [1, H]
    w2, b2 = packed["w2"], packed["b2"]    # bf16 [H, H],     f32 [1, H]
    w3, b3 = packed["w3"], packed["b3"]    # bf16 [H, OUT_P], f32 [1, OUT_P]

    B, in_f = x.shape
    OUT_P = w3.shape[1]

    tb = _choose_tb(B)
    B_P = _round_up(max(B, 1), tb)
    if B_P != B:
        x = jnp.pad(x, ((0, B_P - B), (0, 0)))    # single cheap pad; no zeros+DUS, no cast

    grid = (B_P // tb,)
    const2d = lambda i: (0, 0)   # weights/biases: one block, resident in VMEM across tiles

    flops = 2 * B_P * (in_f * HIDDEN + HIDDEN * HIDDEN + HIDDEN * OUT_P)
    bytes_accessed = (
        B_P * in_f * 4
        + sum(int(a.size) * a.dtype.itemsize for a in (w1, b1, w2, b2, w3, b3))
        + B_P * OUT_P * 4)
    cost = pl.CostEstimate(flops=flops,
                           transcendentals=B_P * OUT_P,
                           bytes_accessed=bytes_accessed)

    out_p = pl.pallas_call(
        _mlp_softmax_kernel,
        out_shape=jax.ShapeDtypeStruct((B_P, OUT_P), jnp.float32),
        grid=grid,
        in_specs=[
            pl.BlockSpec((tb, in_f), lambda i: (i, 0)),     # x tile (full feature dim, no IN padding)
            pl.BlockSpec((in_f, HIDDEN), const2d),          # w1 (resident)
            pl.BlockSpec((1, HIDDEN), const2d),             # b1
            pl.BlockSpec((HIDDEN, HIDDEN), const2d),        # w2
            pl.BlockSpec((1, HIDDEN), const2d),             # b2
            pl.BlockSpec((HIDDEN, OUT_P), const2d),         # w3
            pl.BlockSpec((1, OUT_P), const2d),              # b3
        ],
        out_specs=pl.BlockSpec((tb, OUT_P), lambda i: (i, 0)),
        compiler_params=pltpu.CompilerParams(
            dimension_semantics=("parallel",)),
        cost_estimate=cost,
    )(x, w1, b1, w2, b2, w3, b3)

    return out_p[:B, :out_features]


def init_params(key, in_features, out_features):
    """Deterministic fp32 init, PyTorch-Linear-style uniform(-1/sqrt(fan_in), +).

    Weights stored as [in, out] (transposed from nn.Linear's [out, in])."""
    ks = jax.random.split(key, 6)

    def linear(kw, kb, fan_in, fan_out):
        bound = 1.0 / jnp.sqrt(jnp.float32(fan_in))
        w = jax.random.uniform(kw, (fan_in, fan_out), jnp.float32, -bound, bound)
        b = jax.random.uniform(kb, (1, fan_out), jnp.float32, -bound, bound)
        return w, b

    w1, b1 = linear(ks[0], ks[1], in_features, HIDDEN)
    w2, b2 = linear(ks[2], ks[3], HIDDEN, HIDDEN)
    w3, b3 = linear(ks[4], ks[5], HIDDEN, out_features)
    return {"w1": w1, "b1": b1, "w2": w2, "b2": b2, "w3": w3, "b3": b3}


def pack_params(params, out_features):
    """Cast weights to bf16 for the MXU; pad only the output-class dim to 128 lanes."""
    OUT_P = _round_up(out_features, LANE)

    w1 = params["w1"].astype(jnp.bfloat16)
    b1 = params["b1"].astype(jnp.float32)
    w2 = params["w2"].astype(jnp.bfloat16)
    b2 = params["b2"].astype(jnp.float32)

    w3 = jnp.zeros((HIDDEN, OUT_P), jnp.bfloat16)
    w3 = w3.at[:, :out_features].set(params["w3"].astype(jnp.bfloat16))
    # Padded classes get a huge negative bias -> softmax probability exactly 0.
    b3 = jnp.full((1, OUT_P), NEG_INF, jnp.float32)
    b3 = b3.at[:, :out_features].set(params["b3"].astype(jnp.float32))

    return {"w1": w1, "b1": b1, "w2": w2, "b2": b2, "w3": w3, "b3": b3}


def _reference(x, p):
    """Plain-JAX fp32 reference for sanity check."""
    h = jnp.maximum(x @ p["w1"] + p["b1"], 0.0)
    h = jnp.maximum(h @ p["w2"] + p["b2"], 0.0)
    logits = h @ p["w3"] + p["b3"]
    return jax.nn.softmax(logits, axis=-1)


if __name__ == "__main__":
    in_features = 32
    out_features = 16
    batch = 8

    key = jax.random.PRNGKey(0)
    k_x, k_p = jax.random.split(key)
    x = jax.random.normal(k_x, (batch, in_features), dtype=jnp.float32)

    params = init_params(k_p, in_features, out_features)
    packed = pack_params(params, out_features)

    out = unet_classifier_forward(x, packed, out_features)
    out = jax.block_until_ready(out)

    ref = _reference(x, params)
    assert out.shape == (batch, out_features)
    # bf16 MXU inputs -> loosened tolerance vs fp32 reference.
    assert jnp.allclose(out, ref, atol=2e-2, rtol=2e-2), "mismatch vs reference"
    # softmax rows sum to 1 (exact f32 normalization in the kernel)
    assert jnp.allclose(jnp.sum(out, axis=-1), 1.0, atol=1e-3)

    print("KERNEL_OK")
</pallas_src>

<mosaic_0001>
module attributes {stable_mosaic.version = 11 : i64} {
  func.func @_mlp_softmax_kernel(%arg0: i32, %arg1: memref<128x32xf32, #tpu.memory_space<vmem>>, %arg2: memref<32x512xbf16, #tpu.memory_space<vmem>>, %arg3: memref<1x512xf32, #tpu.memory_space<vmem>>, %arg4: memref<512x512xbf16, #tpu.memory_space<vmem>>, %arg5: memref<1x512xf32, #tpu.memory_space<vmem>>, %arg6: memref<512x128xbf16, #tpu.memory_space<vmem>>, %arg7: memref<1x128xf32, #tpu.memory_space<vmem>>, %arg8: memref<128x128xf32, #tpu.memory_space<vmem>>) attributes {dimension_semantics = [#tpu.dimension_semantics<parallel>], iteration_bounds = array<i64: 1>, scalar_prefetch = 0 : i64, scratch_operands = 0 : i64, tpu.core_type = #tpu.core_type<tc>, window_params = [{transform_indices = @transform_0, window_bounds = array<i64: 128, 32>}, {pipeline_mode = #tpu.pipeline_mode<synchronous>, transform_indices = @transform_1, window_bounds = array<i64: 32, 512>}, {pipeline_mode = #tpu.pipeline_mode<synchronous>, transform_indices = @transform_2, window_bounds = array<i64: 1, 512>}, {pipeline_mode = #tpu.pipeline_mode<synchronous>, transform_indices = @transform_3, window_bounds = array<i64: 512, 512>}, {pipeline_mode = #tpu.pipeline_mode<synchronous>, transform_indices = @transform_4, window_bounds = array<i64: 1, 512>}, {pipeline_mode = #tpu.pipeline_mode<synchronous>, transform_indices = @transform_5, window_bounds = array<i64: 512, 128>}, {pipeline_mode = #tpu.pipeline_mode<synchronous>, transform_indices = @transform_6, window_bounds = array<i64: 1, 128>}, {transform_indices = @transform_7, window_bounds = array<i64: 128, 128>}]} {
    %c0 = arith.constant 0 : index
    %c0_0 = arith.constant 0 : index
    %0 = vector.load %arg1[%c0, %c0_0] : memref<128x32xf32, #tpu.memory_space<vmem>>, vector<128x32xf32>
    %1 = arith.truncf %0 : vector<128x32xf32> to vector<128x32xbf16>
    %c0_1 = arith.constant 0 : index
    %c0_2 = arith.constant 0 : index
    %2 = vector.load %arg2[%c0_1, %c0_2] : memref<32x512xbf16, #tpu.memory_space<vmem>>, vector<32x512xbf16>
    %cst = arith.constant dense<0.000000e+00> : vector<128x512xf32>
    %3 = tpu.matmul %1, %2, %cst {dimension_numbers = #tpu.dot_dimension_numbers<[1], [0], [0], [1], [0, 0, 1, 1], [], []>} : vector<128x32xbf16>, vector<32x512xbf16>, vector<128x512xf32> -> vector<128x512xf32>
    %c0_3 = arith.constant 0 : index
    %c0_4 = arith.constant 0 : index
    %4 = vector.load %arg3[%c0_3, %c0_4] : memref<1x512xf32, #tpu.memory_space<vmem>>, vector<1x512xf32>
    %5 = vector.broadcast %4 : vector<1x512xf32> to vector<128x512xf32>
    %6 = arith.addf %3, %5 : vector<128x512xf32>
    %cst_5 = arith.constant 0.000000e+00 : f32
    %7 = vector.broadcast %cst_5 : f32 to vector<128x512xf32>
    %8 = arith.maximumf %6, %7 : vector<128x512xf32>
    %9 = arith.truncf %8 : vector<128x512xf32> to vector<128x512xbf16>
    %c0_6 = arith.constant 0 : index
    %c0_7 = arith.constant 0 : index
    %10 = vector.load %arg4[%c0_6, %c0_7] : memref<512x512xbf16, #tpu.memory_space<vmem>>, vector<512x512xbf16>
    %cst_8 = arith.constant dense<0.000000e+00> : vector<128x512xf32>
    %11 = tpu.matmul %9, %10, %cst_8 {dimension_numbers = #tpu.dot_dimension_numbers<[1], [0], [0], [1], [0, 0, 1, 1], [], []>} : vector<128x512xbf16>, vector<512x512xbf16>, vector<128x512xf32> -> vector<128x512xf32>
    %c0_9 = arith.constant 0 : index
    %c0_10 = arith.constant 0 : index
    %12 = vector.load %arg5[%c0_9, %c0_10] : memref<1x512xf32, #tpu.memory_space<vmem>>, vector<1x512xf32>
    %13 = vector.broadcast %12 : vector<1x512xf32> to vector<128x512xf32>
    %14 = arith.addf %11, %13 : vector<128x512xf32>
    %cst_11 = arith.constant 0.000000e+00 : f32
    %15 = vector.broadcast %cst_11 : f32 to vector<128x512xf32>
    %16 = arith.maximumf %14, %15 : vector<128x512xf32>
    %17 = arith.truncf %16 : vector<128x512xf32> to vector<128x512xbf16>
    %c0_12 = arith.constant 0 : index
    %c0_13 = arith.constant 0 : index
    %18 = vector.load %arg6[%c0_12, %c0_13] : memref<512x128xbf16, #tpu.memory_space<vmem>>, vector<512x128xbf16>
    %cst_14 = arith.constant dense<0.000000e+00> : vector<128x128xf32>
    %19 = tpu.matmul %17, %18, %cst_14 {dimension_numbers = #tpu.dot_dimension_numbers<[1], [0], [0], [1], [0, 0, 1, 1], [], []>} : vector<128x512xbf16>, vector<512x128xbf16>, vector<128x128xf32> -> vector<128x128xf32>
    %c0_15 = arith.constant 0 : index
    %c0_16 = arith.constant 0 : index
    %20 = vector.load %arg7[%c0_15, %c0_16] : memref<1x128xf32, #tpu.memory_space<vmem>>, vector<1x128xf32>
    %21 = vector.broadcast %20 : vector<1x128xf32> to vector<128x128xf32>
    %22 = arith.addf %19, %21 : vector<128x128xf32>
    %cst_17 = arith.constant dense<0xFF800000> : vector<128xf32>
    %23 = vector.multi_reduction <maximumf>, %22, %cst_17 [1] : vector<128x128xf32> to vector<128xf32>
    %24 = vector.shape_cast %23 : vector<128xf32> to vector<128x1xf32>
    %25 = vector.broadcast %24 : vector<128x1xf32> to vector<128x128xf32>
    %26 = arith.subf %22, %25 : vector<128x128xf32>
    %27 = math.exp %26 : vector<128x128xf32>
    %cst_18 = arith.constant dense<0.000000e+00> : vector<128xf32>
    %28 = vector.multi_reduction <add>, %27, %cst_18 [1] : vector<128x128xf32> to vector<128xf32>
    %29 = vector.shape_cast %28 : vector<128xf32> to vector<128x1xf32>
    %30 = vector.broadcast %29 : vector<128x1xf32> to vector<128x128xf32>
    %31 = arith.divf %27, %30 : vector<128x128xf32>
    %c0_19 = arith.constant 0 : index
    %c0_20 = arith.constant 0 : index
    %32 = vector.load %arg8[%c0_19, %c0_20] : memref<128x128xf32, #tpu.memory_space<vmem>>, vector<128x128xf32>
    tpu.vector_store %arg8[%c0_19, %c0_20], %31 {strides = array<i32>} : memref<128x128xf32, #tpu.memory_space<vmem>>, vector<128x128xf32>,
    return
  }
  func.func @transform_0(%arg0: i32) -> (i32, i32) {
    %c0_i32 = arith.constant 0 : i32
    %c0_i32_0 = arith.constant 0 : i32
    return %arg0, %c0_i32 : i32, i32
  }
  func.func @transform_1(%arg0: i32) -> (i32, i32) {
    %c0_i32 = arith.constant 0 : i32
    %c0_i32_0 = arith.constant 0 : i32
    %c0_i32_1 = arith.constant 0 : i32
    return %c0_i32, %c0_i32_0 : i32, i32
  }
  func.func @transform_2(%arg0: i32) -> (i32, i32) {
    %c0_i32 = arith.constant 0 : i32
    %c0_i32_0 = arith.constant 0 : i32
    %c0_i32_1 = arith.constant 0 : i32
    return %c0_i32, %c0_i32_0 : i32, i32
  }
  func.func @transform_3(%arg0: i32) -> (i32, i32) {
    %c0_i32 = arith.constant 0 : i32
    %c0_i32_0 = arith.constant 0 : i32
    %c0_i32_1 = arith.constant 0 : i32
    return %c0_i32, %c0_i32_0 : i32, i32
  }
  func.func @transform_4(%arg0: i32) -> (i32, i32) {
    %c0_i32 = arith.constant 0 : i32
    %c0_i32_0 = arith.constant 0 : i32
    %c0_i32_1 = arith.constant 0 : i32
    return %c0_i32, %c0_i32_0 : i32, i32
  }
  func.func @transform_5(%arg0: i32) -> (i32, i32) {
    %c0_i32 = arith.constant 0 : i32
    %c0_i32_0 = arith.constant 0 : i32
    %c0_i32_1 = arith.constant 0 : i32
    return %c0_i32, %c0_i32_0 : i32, i32
  }
  func.func @transform_6(%arg0: i32) -> (i32, i32) {
    %c0_i32 = arith.constant 0 : i32
    %c0_i32_0 = arith.constant 0 : i32
    %c0_i32_1 = arith.constant 0 : i32
    return %c0_i32, %c0_i32_0 : i32, i32
  }
  func.func @transform_7(%arg0: i32) -> (i32, i32) {
    %c0_i32 = arith.constant 0 : i32
    %c0_i32_0 = arith.constant 0 : i32
    return %arg0, %c0_i32 : i32, i32
  }
}

</mosaic_0001>

<llo_original>
// kernel: unet_classifier_forward.1
$region0: #{unet_classifier_forward.1}
  #allocation0 [shape = 'u32[]', space=smem, size = 0x4, offset = 0x4, fixed_abs, tag = 'smem constant byte address 0x4 - core index']
  #allocation1 [shape = 'u32[144,128]{1,0:T(1,128)}', space=vmem, size = 0x12000, scoped, tag = 'internal scratch']
  %s0 = inlined_call_operand.vmem [shape: f32[128,32], index: 0, kind: input, shape index: {}]
  %s1 = inlined_call_operand.vmem [shape: bf16[32,512], index: 1, kind: input, shape index: {}]
  %s2 = inlined_call_operand.vmem [shape: f32[1,512], index: 2, kind: input, shape index: {}]
  %s3 = inlined_call_operand.hbm [shape: bf16[512,512], index: 3, kind: input, shape index: {}]
  %s4 = inlined_call_operand.vmem [shape: f32[1,512], index: 4, kind: input, shape index: {}]
  %s5 = inlined_call_operand.hbm [shape: bf16[512,128], index: 5, kind: input, shape index: {}]
  %s6 = inlined_call_operand.vmem [shape: f32[1,128], index: 6, kind: input, shape index: {}]
  %s7 = inlined_call_operand.vmem [shape: f32[128,128], index: 7, kind: output, shape index: {}]
  %s8 = sld [smem:[#allocation0]]
  $region46: #{unet_classifier_forward.1} parent=0
    _
  %s10 = ssub.s32 1, %s8
  %s11 = scalar_select 0, %s10, %s8
  $region1: #{unet_classifier_forward.1} parent=0
    #allocation2 [shape = 'u8[524288]{0}', space=vmem, size = 0x80000, scoped, tag = 'input window, operand 3, single buffered']
    #allocation3 [shape = 's32[1]{0}', space=sflag, size = 0x4, scoped, tag = 'scoped memory for unet_classifier_forward.1']
    #allocation4 [shape = 'u8[131072]{0}', space=vmem, size = 0x20000, scoped, tag = 'input window, operand 5, single buffered']
    #allocation5 [shape = 's32[1]{0}', space=sflag, size = 0x4, scoped, tag = 'scoped memory for unet_classifier_forward.1']
    %12 = vsyncpa [#allocation3], 0
    %13 = vsyncpa [#allocation5], 0
    // Predicated region
    $region2: #{unet_classifier_forward.1} parent=1 // pred_check
      _
    $region3: #{unet_classifier_forward.1} parent=1 // pred_check_branch
      %15 = sbr.rel (0) target = $region5
    $region4: #{unet_classifier_forward.1} parent=1 // pred_region
      _
    $region5: #{unet_classifier_forward.1} parent=1 // pred_fallthru
      _
    // Predicated region
    $region6: #{unet_classifier_forward.1} parent=1 // pred_check
      _
    $region7: #{unet_classifier_forward.1} parent=1 // pred_check_branch
      %17 = sbr.rel (0) target = $region9
    $region8: #{unet_classifier_forward.1} parent=1 // pred_region
      _
    $region9: #{unet_classifier_forward.1} parent=1 // pred_fallthru
      _
    // Predicated region
    $region10: #{unet_classifier_forward.1} parent=1 // pred_check
      _
    $region11: #{unet_classifier_forward.1} parent=1 // pred_check_branch
      %19 = sbr.rel (0) target = $region13
    $region12: #{unet_classifier_forward.1} parent=1 // pred_region
      _
    $region13: #{unet_classifier_forward.1} parent=1 // pred_fallthru
      _
    // Predicated region
    $region14: #{unet_classifier_forward.1} parent=1 // pred_check
      _
    $region15: #{unet_classifier_forward.1} parent=1 // pred_check_branch
      %21 = sbr.rel (0) target = $region17
    $region16: #{unet_classifier_forward.1} parent=1 // pred_region
      %s23 = ssub.s32 16384, 16384
      %24 = vsyncadd [#allocation3], %s23
      %s25 = sshll.u32 [#allocation2], 4
      %s26 = int_to_ptr.vmem [resolvable:$true] %s25
      %31 = dma.hbm_to_vmem [thread:$0]  %s3, 16384, %s26, [#allocation3], 256, 256, 16
    $region17: #{unet_classifier_forward.1} parent=1 // pred_fallthru
      _
    // Predicated region
    $region18: #{unet_classifier_forward.1} parent=1 // pred_check
      _
    $region19: #{unet_classifier_forward.1} parent=1 // pred_check_branch
      %33 = sbr.rel (0) target = $region21
    $region20: #{unet_classifier_forward.1} parent=1 // pred_region
      _
    $region21: #{unet_classifier_forward.1} parent=1 // pred_fallthru
      _
    // Predicated region
    $region22: #{unet_classifier_forward.1} parent=1 // pred_check
      _
    $region23: #{unet_classifier_forward.1} parent=1 // pred_check_branch
      %35 = sbr.rel (0) target = $region25
    $region24: #{unet_classifier_forward.1} parent=1 // pred_region
      %s37 = ssub.s32 4096, 4096
      %38 = vsyncadd [#allocation5], %s37
      %s39 = sshll.u32 [#allocation4], 4
      %s40 = int_to_ptr.vmem [resolvable:$true] %s39
      %45 = dma.hbm_to_vmem [thread:$0]  %s5, 4096, %s40, [#allocation5], 64, 64, 4
    $region25: #{unet_classifier_forward.1} parent=1 // pred_fallthru
      _
    // Predicated region
    $region26: #{unet_classifier_forward.1} parent=1 // pred_check
      _
    $region27: #{unet_classifier_forward.1} parent=1 // pred_check_branch
      %47 = sbr.rel (0) target = $region29
    $region28: #{unet_classifier_forward.1} parent=1 // pred_region
      _
    $region29: #{unet_classifier_forward.1} parent=1 // pred_fallthru
      _
    // Predicated region
    $region30: #{unet_classifier_forward.1} parent=1 // pred_check
      _
    $region31: #{unet_classifier_forward.1} parent=1 // pred_check_branch
      %49 = sbr.rel (0) target = $region33
    $region32: #{unet_classifier_forward.1} parent=1 // pred_region
      %50 = dma.done [#allocation3], 16384
    $region33: #{unet_classifier_forward.1} parent=1 // pred_fallthru
      _
    // Predicated region
    $region34: #{unet_classifier_forward.1} parent=1 // pred_check
      _
    $region35: #{unet_classifier_forward.1} parent=1 // pred_check_branch
      %52 = sbr.rel (0) target = $region37
    $region36: #{unet_classifier_forward.1} parent=1 // pred_region
      %53 = dma.done [#allocation5], 4096
    $region37: #{unet_classifier_forward.1} parent=1 // pred_fallthru
      _
    %v55 = vld [vmem:[%s0] sm:$0xff]
    %v56 = vld [vmem:[%s0 + $0x8] sm:$0xff]
    %v57 = vld [vmem:[%s0 + $0x10] sm:$0xff]
    %v58 = vld [vmem:[%s0 + $0x18] sm:$0xff]
    %v59 = vld [vmem:[%s0 + $0x20] sm:$0xff]
    %v60 = vld [vmem:[%s0 + $0x28] sm:$0xff]
    %v61 = vld [vmem:[%s0 + $0x30] sm:$0xff]
    %v62 = vld [vmem:[%s0 + $0x38] sm:$0xff]
    %v63 = vld [vmem:[%s0 + $0x40] sm:$0xff]
    %v64 = vld [vmem:[%s0 + $0x48] sm:$0xff]
    %v65 = vld [vmem:[%s0 + $0x50] sm:$0xff]
    %v66 = vld [vmem:[%s0 + $0x58] sm:$0xff]
    %v67 = vld [vmem:[%s0 + $0x60] sm:$0xff]
    %v68 = vld [vmem:[%s0 + $0x68] sm:$0xff]
    %v69 = vld [vmem:[%s0 + $0x70] sm:$0xff]
    %v70 = vld [vmem:[%s0 + $0x78] sm:$0xff]
    %v71 = vpack.c.bf16 %v56, %v55
    %v72 = vpack.c.bf16 %v58, %v57
    %v73 = vpack.c.bf16 %v60, %v59
    %v74 = vpack.c.bf16 %v62, %v61
    %v75 = vpack.c.bf16 %v64, %v63
    %v76 = vpack.c.bf16 %v66, %v65
    %v77 = vpack.c.bf16 %v68, %v67
    %v78 = vpack.c.bf16 %v70, %v69
    %v79 = vld [vmem:[%s1] sm:$0xff]
    %v80 = vld [vmem:[%s1 + $0x8] sm:$0xff]
    %v81 = vld [vmem:[%s1 + $0x10] sm:$0xff]
    %v82 = vld [vmem:[%s1 + $0x18] sm:$0xff]
    %v83 = vld [vmem:[%s1 + $0x20] sm:$0xff]
    %v84 = vld [vmem:[%s1 + $0x28] sm:$0xff]
    %v85 = vld [vmem:[%s1 + $0x30] sm:$0xff]
    %v86 = vld [vmem:[%s1 + $0x38] sm:$0xff]
    %v87 = vld [vmem:[%s2] sm:$0xf]
    %v89 = vlaneseq
    %v90 = vshrl.u32 %v89, 7
    %v91 = vsub.s32 0, %v90
    %v92 = vrot.slane %v87, %v91
    %v93 = vlaneseq
    %v94 = vshrl.u32 %v93, 7
    %v95 = vsub.s32 1, %v94
    %v96 = vrot.slane %v87, %v95
    %v97 = vlaneseq
    %v98 = vshrl.u32 %v97, 7
    %v99 = vsub.s32 2, %v98
    %v100 = vrot.slane %v87, %v99
    %v101 = vlaneseq
    %v102 = vshrl.u32 %v101, 7
    %v103 = vsub.s32 3, %v102
    %v104 = vrot.slane %v87, %v103
    %v117 = vunpack.c.l.b16 %v79
    %v118 = vunpack.c.h.b16 %v79
    %v119 = vunpack.c.l.b16 %v80
    %v120 = vunpack.c.h.b16 %v80
    %v121 = vunpack.c.l.b16 %v81
    %v122 = vunpack.c.h.b16 %v81
    %v123 = vunpack.c.l.b16 %v82
    %v124 = vunpack.c.h.b16 %v82
    %v125 = vunpack.c.l.b16 %v83
    %v126 = vunpack.c.h.b16 %v83
    %v127 = vunpack.c.l.b16 %v84
    %v128 = vunpack.c.h.b16 %v84
    %v129 = vunpack.c.l.b16 %v85
    %v130 = vunpack.c.h.b16 %v85
    %v131 = vunpack.c.l.b16 %v86
    %v132 = vunpack.c.h.b16 %v86
    %v133 = vpack.c.b16 %v121, %v117
    %v134 = vpack.c.b16 %v122, %v118
    %v135 = vpack.c.b16 %v123, %v119
    %v136 = vpack.c.b16 %v124, %v120
    %v137 = vpack.c.b16 %v129, %v125
    %v138 = vpack.c.b16 %v130, %v126
    %v139 = vpack.c.b16 %v131, %v127
    %v140 = vpack.c.b16 %v132, %v128
    %vm149 = vcmask 261120
    %v151 = vsel %vm149, %v71, 0
    %v154 = vsel %vm149, %v72, 0
    %v157 = vsel %vm149, %v73, 0
    %v160 = vsel %vm149, %v74, 0
    %v163 = vsel %vm149, %v75, 0
    %v166 = vsel %vm149, %v76, 0
    %v169 = vsel %vm149, %v77, 0
    %v172 = vsel %vm149, %v78, 0
    %174 = vmatprep.subr.bf16.mxu0 %v134
    %175 = vmatpush1.bf16.msra.mxu0 %v133
    %176 = vmatprep.subr.bf16.mxu0 %v138
    %177 = vmatpush1.bf16.msra.mxu0 %v137
    %178 = vmatprep.subr.bf16.mxu0 0
    %179 = vmatpush1.bf16.msra.mxu0 0
    %180 = vmatprep.subr.bf16.mxu0 0
    %181 = vmatpush1.bf16.msra.mxu0 0
    %182 = vmatprep.subr.bf16.mxu0 0
    %183 = vmatpush1.bf16.msra.mxu0 0
    %184 = vmatprep.subr.bf16.mxu0 0
    %185 = vmatpush1.bf16.msra.mxu0 0
    %186 = vmatprep.subr.bf16.mxu0 0
    %187 = vmatpush1.bf16.msra.mxu0 0
    %188 = vmatprep.subr.bf16.mxu0 0
    %189 = vmatpush1.bf16.msra.mxu0 0
    %190 = vmatprep.subr.bf16.mxu0 0
    %191 = vmatpush1.bf16.msra.mxu0 0
    %192 = vmatprep.subr.bf16.mxu0 0
    %193 = vmatpush1.bf16.msra.mxu0 0
    %194 = vmatprep.subr.bf16.mxu0 0
    %195 = vmatpush1.bf16.msra.mxu0 0
    %196 = vmatprep.subr.bf16.mxu0 0
    %197 = vmatpush1.bf16.msra.mxu0 0
    %198 = vmatprep.subr.bf16.mxu0 0
    %199 = vmatpush1.bf16.msra.mxu0 0
    %200 = vmatprep.subr.bf16.mxu0 0
    %201 = vmatpush1.bf16.msra.mxu0 0
    %202 = vmatprep.subr.bf16.mxu0 0
    %203 = vmatpush1.bf16.msra.mxu0 0
    %204 = vmatprep.subr.bf16.mxu0 0
    %205 = vmatpush1.bf16.msra.mxu0 0
    %206 = vmatprep.mubr.bf16.mxu0 0
    %207 = vmatmul.mubr.bf16.gmra.mrb[0].mxu0 %v151
    %v208 = vpop.f32.mrb[0].mxu0
    %v209 = vadd.f32 %v92, %v208
    %v210 = vpop.f32.mrb[0].mxu0
    %v211 = vadd.f32 %v96, %v210
    %v212 = vpop.f32.mrb[0].mxu0
    %v213 = vadd.f32 %v92, %v212
    %v214 = vpop.f32.mrb[0].mxu0
    %v215 = vadd.f32 %v96, %v214
    %216 = vmatprep.mubr.bf16.mxu0 0
    %217 = vmatmul.mubr.bf16.gmra.mrb[0].mxu0 %v154
    %v218 = vpop.f32.mrb[0].mxu0
    %v219 = vadd.f32 %v92, %v218
    %v220 = vpop.f32.mrb[0].mxu0
    %v221 = vadd.f32 %v96, %v220
    %v222 = vpop.f32.mrb[0].mxu0
    %v223 = vadd.f32 %v92, %v222
    %v224 = vpop.f32.mrb[0].mxu0
    %v225 = vadd.f32 %v96, %v224
    %226 = vmatprep.mubr.bf16.mxu0 0
    %227 = vmatmul.mubr.bf16.gmra.mrb[0].mxu0 %v157
    %v228 = vpop.f32.mrb[0].mxu0
    %v229 = vadd.f32 %v92, %v228
    %v230 = vpop.f32.mrb[0].mxu0
    %v231 = vadd.f32 %v96, %v230
    %v232 = vpop.f32.mrb[0].mxu0
    %v233 = vadd.f32 %v92, %v232
    %v234 = vpop.f32.mrb[0].mxu0
    %v235 = vadd.f32 %v96, %v234
    %236 = vmatprep.mubr.bf16.mxu0 0
    %237 = vmatmul.mubr.bf16.gmra.mrb[0].mxu0 %v160
    %v238 = vpop.f32.mrb[0].mxu0
    %v239 = vadd.f32 %v92, %v238
    %v240 = vpop.f32.mrb[0].mxu0
    %v241 = vadd.f32 %v96, %v240
    %v242 = vpop.f32.mrb[0].mxu0
    %v243 = vadd.f32 %v92, %v242
    %v244 = vpop.f32.mrb[0].mxu0
    %v245 = vadd.f32 %v96, %v244
    %246 = vmatprep.mubr.bf16.mxu0 0
    %247 = vmatmul.mubr.bf16.gmra.mrb[0].mxu0 %v163
    %v248 = vpop.f32.mrb[0].mxu0
    %v249 = vadd.f32 %v92, %v248
    %v250 = vpop.f32.mrb[0].mxu0
    %v251 = vadd.f32 %v96, %v250
    %v252 = vpop.f32.mrb[0].mxu0
    %v253 = vadd.f32 %v92, %v252
    %v254 = vpop.f32.mrb[0].mxu0
    %v255 = vadd.f32 %v96, %v254
    %256 = vmatprep.mubr.bf16.mxu0 0
    %257 = vmatmul.mubr.bf16.gmra.mrb[0].mxu0 %v166
    %v258 = vpop.f32.mrb[0].mxu0
    %v259 = vadd.f32 %v92, %v258
    %v260 = vpop.f32.mrb[0].mxu0
    %v261 = vadd.f32 %v96, %v260
    %v262 = vpop.f32.mrb[0].mxu0
    %v263 = vadd.f32 %v92, %v262
    %v264 = vpop.f32.mrb[0].mxu0
    %v265 = vadd.f32 %v96, %v264
    %266 = vmatprep.mubr.bf16.mxu0 0
    %267 = vmatmul.mubr.bf16.gmra.mrb[0].mxu0 %v169
    %v268 = vpop.f32.mrb[0].mxu0
    %v269 = vadd.f32 %v92, %v268
    %v270 = vpop.f32.mrb[0].mxu0
    %v271 = vadd.f32 %v96, %v270
    %v272 = vpop.f32.mrb[0].mxu0
    %v273 = vadd.f32 %v92, %v272
    %v274 = vpop.f32.mrb[0].mxu0
    %v275 = vadd.f32 %v96, %v274
    %276 = vmatprep.mubr.bf16.mxu0 0
    %277 = vmatmul.mubr.bf16.gmra.mrb[0].mxu0 %v172
    %v278 = vpop.f32.mrb[0].mxu0
    %v279 = vadd.f32 %v92, %v278
    %v280 = vpop.f32.mrb[0].mxu0
    %v281 = vadd.f32 %v96, %v280
    %v282 = vpop.f32.mrb[0].mxu0
    %v283 = vadd.f32 %v92, %v282
    %v284 = vpop.f32.mrb[0].mxu0
    %v285 = vadd.f32 %v96, %v284
    %286 = vdwg.mxu0
    %287 = vmatprep.subr.bf16.mxu0 %v136
    %288 = vmatpush1.bf16.msra.mxu0 %v135
    %289 = vmatprep.subr.bf16.mxu0 %v140
    %290 = vmatpush1.bf16.msra.mxu0 %v139
    %291 = vmatprep.subr.bf16.mxu0 0
    %292 = vmatpush1.bf16.msra.mxu0 0
    %293 = vmatprep.subr.bf16.mxu0 0
    %294 = vmatpush1.bf16.msra.mxu0 0
    %295 = vmatprep.subr.bf16.mxu0 0
    %296 = vmatpush1.bf16.msra.mxu0 0
    %297 = vmatprep.subr.bf16.mxu0 0
    %298 = vmatpush1.bf16.msra.mxu0 0
    %299 = vmatprep.subr.bf16.mxu0 0
    %300 = vmatpush1.bf16.msra.mxu0 0
    %301 = vmatprep.subr.bf16.mxu0 0
    %302 = vmatpush1.bf16.msra.mxu0 0
    %303 = vmatprep.subr.bf16.mxu0 0
    %304 = vmatpush1.bf16.msra.mxu0 0
    %305 = vmatprep.subr.bf16.mxu0 0
    %306 = vmatpush1.bf16.msra.mxu0 0
    %307 = vmatprep.subr.bf16.mxu0 0
    %308 = vmatpush1.bf16.msra.mxu0 0
    %309 = vmatprep.subr.bf16.mxu0 0
    %310 = vmatpush1.bf16.msra.mxu0 0
    %311 = vmatprep.subr.bf16.mxu0 0
    %312 = vmatpush1.bf16.msra.mxu0 0
    %313 = vmatprep.subr.bf16.mxu0 0
    %314 = vmatpush1.bf16.msra.mxu0 0
    %315 = vmatprep.subr.bf16.mxu0 0
    %316 = vmatpush1.bf16.msra.mxu0 0
    %317 = vmatprep.subr.bf16.mxu0 0
    %318 = vmatpush1.bf16.msra.mxu0 0
    %319 = vmatprep.mubr.bf16.mxu0 0
    %320 = vmatmul.mubr.bf16.gmra.mrb[0].mxu0 %v151
    %v321 = vpop.f32.mrb[0].mxu0
    %v322 = vadd.f32 %v100, %v321
    %v323 = vpop.f32.mrb[0].mxu0
    %v324 = vadd.f32 %v104, %v323
    %v325 = vpop.f32.mrb[0].mxu0
    %v326 = vadd.f32 %v100, %v325
    %v327 = vpop.f32.mrb[0].mxu0
    %v328 = vadd.f32 %v104, %v327
    %329 = vmatprep.mubr.bf16.mxu0 0
    %330 = vmatmul.mubr.bf16.gmra.mrb[0].mxu0 %v154
    %v331 = vpop.f32.mrb[0].mxu0
    %v332 = vadd.f32 %v100, %v331
    %v333 = vpop.f32.mrb[0].mxu0
    %v334 = vadd.f32 %v104, %v333
    %v335 = vpop.f32.mrb[0].mxu0
    %v336 = vadd.f32 %v100, %v335
    %v337 = vpop.f32.mrb[0].mxu0
    %v338 = vadd.f32 %v104, %v337
    %339 = vmatprep.mubr.bf16.mxu0 0
    %340 = vmatmul.mubr.bf16.gmra.mrb[0].mxu0 %v157
    %v341 = vpop.f32.mrb[0].mxu0
    %v342 = vadd.f32 %v100, %v341
    %v343 = vpop.f32.mrb[0].mxu0
    %v344 = vadd.f32 %v104, %v343
    %v345 = vpop.f32.mrb[0].mxu0
    %v346 = vadd.f32 %v100, %v345
    %v347 = vpop.f32.mrb[0].mxu0
    %v348 = vadd.f32 %v104, %v347
    %349 = vmatprep.mubr.bf16.mxu0 0
    %350 = vmatmul.mubr.bf16.gmra.mrb[0].mxu0 %v160
    %v351 = vpop.f32.mrb[0].mxu0
    %v352 = vadd.f32 %v100, %v351
    %v353 = vpop.f32.mrb[0].mxu0
    %v354 = vadd.f32 %v104, %v353
    %v355 = vpop.f32.mrb[0].mxu0
    %v356 = vadd.f32 %v100, %v355
    %v357 = vpop.f32.mrb[0].mxu0
    %v358 = vadd.f32 %v104, %v357
    %359 = vmatprep.mubr.bf16.mxu0 0
    %360 = vmatmul.mubr.bf16.gmra.mrb[0].mxu0 %v163
    %v361 = vpop.f32.mrb[0].mxu0
    %v362 = vadd.f32 %v100, %v361
    %v363 = vpop.f32.mrb[0].mxu0
    %v364 = vadd.f32 %v104, %v363
    %v365 = vpop.f32.mrb[0].mxu0
    %v366 = vadd.f32 %v100, %v365
    %v367 = vpop.f32.mrb[0].mxu0
    %v368 = vadd.f32 %v104, %v367
    %369 = vmatprep.mubr.bf16.mxu0 0
    %370 = vmatmul.mubr.bf16.gmra.mrb[0].mxu0 %v166
    %v371 = vpop.f32.mrb[0].mxu0
    %v372 = vadd.f32 %v100, %v371
    %v373 = vpop.f32.mrb[0].mxu0
    %v374 = vadd.f32 %v104, %v373
    %v375 = vpop.f32.mrb[0].mxu0
    %v376 = vadd.f32 %v100, %v375
    %v377 = vpop.f32.mrb[0].mxu0
    %v378 = vadd.f32 %v104, %v377
    %379 = vmatprep.mubr.bf16.mxu0 0
    %380 = vmatmul.mubr.bf16.gmra.mrb[0].mxu0 %v169
    %v381 = vpop.f32.mrb[0].mxu0
    %v382 = vadd.f32 %v100, %v381
    %v383 = vpop.f32.mrb[0].mxu0
    %v384 = vadd.f32 %v104, %v383
    %v385 = vpop.f32.mrb[0].mxu0
    %v386 = vadd.f32 %v100, %v385
    %v387 = vpop.f32.mrb[0].mxu0
    %v388 = vadd.f32 %v104, %v387
    %389 = vmatprep.mubr.bf16.mxu0 0
    %390 = vmatmul.mubr.bf16.gmra.mrb[0].mxu0 %v172
    %v391 = vpop.f32.mrb[0].mxu0
    %v392 = vadd.f32 %v100, %v391
    %v393 = vpop.f32.mrb[0].mxu0
    %v394 = vadd.f32 %v104, %v393
    %v395 = vpop.f32.mrb[0].mxu0
    %v396 = vadd.f32 %v100, %v395
    %v397 = vpop.f32.mrb[0].mxu0
    %v398 = vadd.f32 %v104, %v397
    %399 = vdwg.mxu0
    %v400 = vmax.f32 %v209, 0.0
    %v401 = vmax.f32 %v211, 0.0
    %v402 = vmax.f32 %v322, 0.0
    %v403 = vmax.f32 %v324, 0.0
    %v404 = vmax.f32 %v213, 0.0
    %v405 = vmax.f32 %v215, 0.0
    %v406 = vmax.f32 %v326, 0.0
    %v407 = vmax.f32 %v328, 0.0
    %v408 = vmax.f32 %v219, 0.0
    %v409 = vmax.f32 %v221, 0.0
    %v410 = vmax.f32 %v332, 0.0
    %v411 = vmax.f32 %v334, 0.0
    %v412 = vmax.f32 %v223, 0.0
    %v413 = vmax.f32 %v225, 0.0
    %v414 = vmax.f32 %v336, 0.0
    %v415 = vmax.f32 %v338, 0.0
    %v416 = vmax.f32 %v229, 0.0
    %v417 = vmax.f32 %v231, 0.0
    %v418 = vmax.f32 %v342, 0.0
    %v419 = vmax.f32 %v344, 0.0
    %v420 = vmax.f32 %v233, 0.0
    %v421 = vmax.f32 %v235, 0.0
    %v422 = vmax.f32 %v346, 0.0
    %v423 = vmax.f32 %v348, 0.0
    %v424 = vmax.f32 %v239, 0.0
    %v425 = vmax.f32 %v241, 0.0
    %v426 = vmax.f32 %v352, 0.0
    %v427 = vmax.f32 %v354, 0.0
    %v428 = vmax.f32 %v243, 0.0
    %v429 = vmax.f32 %v245, 0.0
    %v430 = vmax.f32 %v356, 0.0
    %v431 = vmax.f32 %v358, 0.0
    %v432 = vmax.f32 %v249, 0.0
    %v433 = vmax.f32 %v251, 0.0
    %v434 = vmax.f32 %v362, 0.0
    %v435 = vmax.f32 %v364, 0.0
    %v436 = vmax.f32 %v253, 0.0
    %v437 = vmax.f32 %v255, 0.0
    %v438 = vmax.f32 %v366, 0.0
    %v439 = vmax.f32 %v368, 0.0
    %v440 = vmax.f32 %v259, 0.0
    %v441 = vmax.f32 %v261, 0.0
    %v442 = vmax.f32 %v372, 0.0
    %v443 = vmax.f32 %v374, 0.0
    %v444 = vmax.f32 %v263, 0.0
    %v445 = vmax.f32 %v265, 0.0
    %v446 = vmax.f32 %v376, 0.0
    %v447 = vmax.f32 %v378, 0.0
    %v448 = vmax.f32 %v269, 0.0
    %v449 = vmax.f32 %v271, 0.0
    %v450 = vmax.f32 %v382, 0.0
    %v451 = vmax.f32 %v384, 0.0
    %v452 = vmax.f32 %v273, 0.0
    %v453 = vmax.f32 %v275, 0.0
    %v454 = vmax.f32 %v386, 0.0
    %v455 = vmax.f32 %v388, 0.0
    %v456 = vmax.f32 %v279, 0.0
    %v457 = vmax.f32 %v281, 0.0
    %v458 = vmax.f32 %v392, 0.0
    %v459 = vmax.f32 %v394, 0.0
    %v460 = vmax.f32 %v283, 0.0
    %v461 = vmax.f32 %v285, 0.0
    %v462 = vmax.f32 %v396, 0.0
    %v463 = vmax.f32 %v398, 0.0
    %v464 = vpack.c.bf16 %v404, %v400
    %v465 = vpack.c.bf16 %v405, %v401
    %v466 = vpack.c.bf16 %v406, %v402
    %v467 = vpack.c.bf16 %v407, %v403
    %v468 = vpack.c.bf16 %v412, %v408
    %v469 = vpack.c.bf16 %v413, %v409
    %v470 = vpack.c.bf16 %v414, %v410
    %v471 = vpack.c.bf16 %v415, %v411
    %v472 = vpack.c.bf16 %v420, %v416
    %v473 = vpack.c.bf16 %v421, %v417
    %v474 = vpack.c.bf16 %v422, %v418
    %v475 = vpack.c.bf16 %v423, %v419
    %v476 = vpack.c.bf16 %v428, %v424
    %v477 = vpack.c.bf16 %v429, %v425
    %v478 = vpack.c.bf16 %v430, %v426
    %v479 = vpack.c.bf16 %v431, %v427
    %v480 = vpack.c.bf16 %v436, %v432
    %v481 = vpack.c.bf16 %v437, %v433
    %v482 = vpack.c.bf16 %v438, %v434
    %v483 = vpack.c.bf16 %v439, %v435
    %v484 = vpack.c.bf16 %v444, %v440
    %v485 = vpack.c.bf16 %v445, %v441
    %v486 = vpack.c.bf16 %v446, %v442
    %v487 = vpack.c.bf16 %v447, %v443
    %v488 = vpack.c.bf16 %v452, %v448
    %v489 = vpack.c.bf16 %v453, %v449
    %v490 = vpack.c.bf16 %v454, %v450
    %v491 = vpack.c.bf16 %v455, %v451
    %v492 = vpack.c.bf16 %v460, %v456
    %v493 = vpack.c.bf16 %v461, %v457
    %v494 = vpack.c.bf16 %v462, %v458
    %v495 = vpack.c.bf16 %v463, %v459
    %v496 = vld [vmem:[#allocation2] sm:$0xff]
    %v497 = vld [vmem:[#allocation2 + $0x8] sm:$0xff]
    %v498 = vld [vmem:[#allocation2 + $0x10] sm:$0xff]
    %v499 = vld [vmem:[#allocation2 + $0x18] sm:$0xff]
    %v500 = vld [vmem:[#allocation2 + $0x20] sm:$0xff]
    %v501 = vld [vmem:[#allocation2 + $0x28] sm:$0xff]
    %v502 = vld [vmem:[#allocation2 + $0x30] sm:$0xff]
    %v503 = vld [vmem:[#allocation2 + $0x38] sm:$0xff]
    %v504 = vld [vmem:[#allocation2 + $0x40] sm:$0xff]
    %v505 = vld [vmem:[#allocation2 + $0x48] sm:$0xff]
    %v506 = vld [vmem:[#allocation2 + $0x50] sm:$0xff]
    %v507 = vld [vmem:[#allocation2 + $0x58] sm:$0xff]
    %v508 = vld [vmem:[#allocation2 + $0x60] sm:$0xff]
    %v509 = vld [vmem:[#allocation2 + $0x68] sm:$0xff]
    %v510 = vld [vmem:[#allocation2 + $0x70] sm:$0xff]
    %v511 = vld [vmem:[#allocation2 + $0x78] sm:$0xff]
    %v512 = vld [vmem:[#allocation2 + $0x80] sm:$0xff]
    %v513 = vld [vmem:[#allocation2 + $0x88] sm:$0xff]
    %v514 = vld [vmem:[#allocation2 + $0x90] sm:$0xff]
    %v515 = vld [vmem:[#allocation2 + $0x98] sm:$0xff]
    %v516 = vld [vmem:[#allocation2 + $0xa0] sm:$0xff]
    %v517 = vld [vmem:[#allocation2 + $0xa8] sm:$0xff]
    %v518 = vld [vmem:[#allocation2 + $0xb0] sm:$0xff]
    %v519 = vld [vmem:[#allocation2 + $0xb8] sm:$0xff]
    %v520 = vld [vmem:[#allocation2 + $0xc0] sm:$0xff]
    %v521 = vld [vmem:[#allocation2 + $0xc8] sm:$0xff]
    %v522 = vld [vmem:[#allocation2 + $0xd0] sm:$0xff]
    %v523 = vld [vmem:[#allocation2 + $0xd8] sm:$0xff]
    %v524 = vld [vmem:[#allocation2 + $0xe0] sm:$0xff]
    %v525 = vld [vmem:[#allocation2 + $0xe8] sm:$0xff]
    %v526 = vld [vmem:[#allocation2 + $0xf0] sm:$0xff]
    %v527 = vld [vmem:[#allocation2 + $0xf8] sm:$0xff]
    %v528 = vld [vmem:[#allocation2 + $0x100] sm:$0xff]
    %v529 = vld [vmem:[#allocation2 + $0x108] sm:$0xff]
    %v530 = vld [vmem:[#allocation2 + $0x110] sm:$0xff]
    %v531 = vld [vmem:[#allocation2 + $0x118] sm:$0xff]
    %v532 = vld [vmem:[#allocation2 + $0x120] sm:$0xff]
    %v533 = vld [vmem:[#allocation2 + $0x128] sm:$0xff]
    %v534 = vld [vmem:[#allocation2 + $0x130] sm:$0xff]
    %v535 = vld [vmem:[#allocation2 + $0x138] sm:$0xff]
    %v536 = vld [vmem:[#allocation2 + $0x140] sm:$0xff]
    %v537 = vld [vmem:[#allocation2 + $0x148] sm:$0xff]
    %v538 = vld [vmem:[#allocation2 + $0x150] sm:$0xff]
    %v539 = vld [vmem:[#allocation2 + $0x158] sm:$0xff]
    %v540 = vld [vmem:[#allocation2 + $0x160] sm:$0xff]
    %v541 = vld [vmem:[#allocation2 + $0x168] sm:$0xff]
    %v542 = vld [vmem:[#allocation2 + $0x170] sm:$0xff]
    %v543 = vld [vmem:[#allocation2 + $0x178] sm:$0xff]
    %v544 = vld [vmem:[#allocation2 + $0x180] sm:$0xff]
    %v545 = vld [vmem:[#allocation2 + $0x188] sm:$0xff]
    %v546 = vld [vmem:[#allocation2 + $0x190] sm:$0xff]
    %v547 = vld [vmem:[#allocation2 + $0x198] sm:$0xff]
    %v548 = vld [vmem:[#allocation2 + $0x1a0] sm:$0xff]
    %v549 = vld [vmem:[#allocation2 + $0x1a8] sm:$0xff]
    %v550 = vld [vmem:[#allocation2 + $0x1b0] sm:$0xff]
    %v551 = vld [vmem:[#allocation2 + $0x1b8] sm:$0xff]
    %v552 = vld [vmem:[#allocation2 + $0x1c0] sm:$0xff]
    %v553 = vld [vmem:[#allocation2 + $0x1c8] sm:$0xff]
    %v554 = vld [vmem:[#allocation2 + $0x1d0] sm:$0xff]
    %v555 = vld [vmem:[#allocation2 + $0x1d8] sm:$0xff]
    %v556 = vld [vmem:[#allocation2 + $0x1e0] sm:$0xff]
    %v557 = vld [vmem:[#allocation2 + $0x1e8] sm:$0xff]
    %v558 = vld [vmem:[#allocation2 + $0x1f0] sm:$0xff]
    %v559 = vld [vmem:[#allocation2 + $0x1f8] sm:$0xff]
    %v560 = vld [vmem:[#allocation2 + $0x200] sm:$0xff]
    %v561 = vld [vmem:[#allocation2 + $0x208] sm:$0xff]
    %v562 = vld [vmem:[#allocation2 + $0x210] sm:$0xff]
    %v563 = vld [vmem:[#allocation2 + $0x218] sm:$0xff]
    %v564 = vld [vmem:[#allocation2 + $0x220] sm:$0xff]
    %v565 = vld [vmem:[#allocation2 + $0x228] sm:$0xff]
    %v566 = vld [vmem:[#allocation2 + $0x230] sm:$0xff]
    %v567 = vld [vmem:[#allocation2 + $0x238] sm:$0xff]
    %v568 = vld [vmem:[#allocation2 + $0x240] sm:$0xff]
    %v569 = vld [vmem:[#allocation2 + $0x248] sm:$0xff]
    %v570 = vld [vmem:[#allocation2 + $0x250] sm:$0xff]
    %v571 = vld [vmem:[#allocation2 + $0x258] sm:$0xff]
    %v572 = vld [vmem:[#allocation2 + $0x260] sm:$0xff]
    %v573 = vld [vmem:[#allocation2 + $0x268] sm:$0xff]
    %v574 = vld [vmem:[#allocation2 + $0x270] sm:$0xff]
    %v575 = vld [vmem:[#allocation2 + $0x278] sm:$0xff]
    %v576 = vld [vmem:[#allocation2 + $0x280] sm:$0xff]
    %v577 = vld [vmem:[#allocation2 + $0x288] sm:$0xff]
    %v578 = vld [vmem:[#allocation2 + $0x290] sm:$0xff]
    %v579 = vld [vmem:[#allocation2 + $0x298] sm:$0xff]
    %v580 = vld [vmem:[#allocation2 + $0x2a0] sm:$0xff]
    %v581 = vld [vmem:[#allocation2 + $0x2a8] sm:$0xff]
    %v582 = vld [vmem:[#allocation2 + $0x2b0] sm:$0xff]
    %v583 = vld [vmem:[#allocation2 + $0x2b8] sm:$0xff]
    %v584 = vld [vmem:[#allocation2 + $0x2c0] sm:$0xff]
    %v585 = vld [vmem:[#allocation2 + $0x2c8] sm:$0xff]
    %v586 = vld [vmem:[#allocation2 + $0x2d0] sm:$0xff]
    %v587 = vld [vmem:[#allocation2 + $0x2d8] sm:$0xff]
    %v588 = vld [vmem:[#allocation2 + $0x2e0] sm:$0xff]
    %v589 = vld [vmem:[#allocation2 + $0x2e8] sm:$0xff]
    %v590 = vld [vmem:[#allocation2 + $0x2f0] sm:$0xff]
    %v591 = vld [vmem:[#allocation2 + $0x2f8] sm:$0xff]
    %v592 = vld [vmem:[#allocation2 + $0x300] sm:$0xff]
    %v593 = vld [vmem:[#allocation2 + $0x308] sm:$0xff]
    %v594 = vld [vmem:[#allocation2 + $0x310] sm:$0xff]
    %v595 = vld [vmem:[#allocation2 + $0x318] sm:$0xff]
    %v596 = vld [vmem:[#allocation2 + $0x320] sm:$0xff]
    %v597 = vld [vmem:[#allocation2 + $0x328] sm:$0xff]
    %v598 = vld [vmem:[#allocation2 + $0x330] sm:$0xff]
    %v599 = vld [vmem:[#allocation2 + $0x338] sm:$0xff]
    %v600 = vld [vmem:[#allocation2 + $0x340] sm:$0xff]
    %v601 = vld [vmem:[#allocation2 + $0x348] sm:$0xff]
    %v602 = vld [vmem:[#allocation2 + $0x350] sm:$0xff]
    %v603 = vld [vmem:[#allocation2 + $0x358] sm:$0xff]
    %v604 = vld [vmem:[#allocation2 + $0x360] sm:$0xff]
    %v605 = vld [vmem:[#allocation2 + $0x368] sm:$0xff]
    %v606 = vld [vmem:[#allocation2 + $0x370] sm:$0xff]
    %v607 = vld [vmem:[#allocation2 + $0x378] sm:$0xff]
    %v608 = vld [vmem:[#allocation2 + $0x380] sm:$0xff]
    %v609 = vld [vmem:[#allocation2 + $0x388] sm:$0xff]
    %v610 = vld [vmem:[#allocation2 + $0x390] sm:$0xff]
    %v611 = vld [vmem:[#allocation2 + $0x398] sm:$0xff]
    %v612 = vld [vmem:[#allocation2 + $0x3a0] sm:$0xff]
    %v613 = vld [vmem:[#allocation2 + $0x3a8] sm:$0xff]
    %v614 = vld [vmem:[#allocation2 + $0x3b0] sm:$0xff]
    %v615 = vld [vmem:[#allocation2 + $0x3b8] sm:$0xff]
    %v616 = vld [vmem:[#allocation2 + $0x3c0] sm:$0xff]
    %v617 = vld [vmem:[#allocation2 + $0x3c8] sm:$0xff]
    %v618 = vld [vmem:[#allocation2 + $0x3d0] sm:$0xff]
    %v619 = vld [vmem:[#allocation2 + $0x3d8] sm:$0xff]
    %v620 = vld [vmem:[#allocation2 + $0x3e0] sm:$0xff]
    %v621 = vld [vmem:[#allocation2 + $0x3e8] sm:$0xff]
    %v622 = vld [vmem:[#allocation2 + $0x3f0] sm:$0xff]
    %v623 = vld [vmem:[#allocation2 + $0x3f8] sm:$0xff]
    %v624 = vld [vmem:[%s4] sm:$0xf]
    %v626 = vlaneseq
    %v627 = vshrl.u32 %v626, 7
    %v628 = vsub.s32 0, %v627
    %v629 = vrot.slane %v624, %v628
    %v630 = vlaneseq
    %v631 = vshrl.u32 %v630, 7
    %v632 = vsub.s32 1, %v631
    %v633 = vrot.slane %v624, %v632
    %v634 = vlaneseq
    %v635 = vshrl.u32 %v634, 7
    %v636 = vsub.s32 2, %v635
    %v637 = vrot.slane %v624, %v636
    %v638 = vlaneseq
    %v639 = vshrl.u32 %v638, 7
    %v640 = vsub.s32 3, %v639
    %v641 = vrot.slane %v624, %v640
    %v774 = vunpack.c.l.b16 %v496
    %v775 = vunpack.c.h.b16 %v496
    %v776 = vunpack.c.l.b16 %v497
    %v777 = vunpack.c.h.b16 %v497
    %v778 = vunpack.c.l.b16 %v498
    %v779 = vunpack.c.h.b16 %v498
    %v780 = vunpack.c.l.b16 %v499
    %v781 = vunpack.c.h.b16 %v499
    %v782 = vunpack.c.l.b16 %v500
    %v783 = vunpack.c.h.b16 %v500
    %v784 = vunpack.c.l.b16 %v501
    %v785 = vunpack.c.h.b16 %v501
    %v786 = vunpack.c.l.b16 %v502
    %v787 = vunpack.c.h.b16 %v502
    %v788 = vunpack.c.l.b16 %v503
    %v789 = vunpack.c.h.b16 %v503
    %v790 = vunpack.c.l.b16 %v504
    %v791 = vunpack.c.h.b16 %v504
    %v792 = vunpack.c.l.b16 %v505
    %v793 = vunpack.c.h.b16 %v505
    %v794 = vunpack.c.l.b16 %v506
    %v795 = vunpack.c.h.b16 %v506
    %v796 = vunpack.c.l.b16 %v507
    %v797 = vunpack.c.h.b16 %v507
    %v798 = vunpack.c.l.b16 %v508
    %v799 = vunpack.c.h.b16 %v508
    %v800 = vunpack.c.l.b16 %v509
    %v801 = vunpack.c.h.b16 %v509
    %v802 = vunpack.c.l.b16 %v510
    %v803 = vunpack.c.h.b16 %v510
    %v804 = vunpack.c.l.b16 %v511
    %v805 = vunpack.c.h.b16 %v511
    %v806 = vunpack.c.l.b16 %v512
    %v807 = vunpack.c.h.b16 %v512
    %v808 = vunpack.c.l.b16 %v513
    %v809 = vunpack.c.h.b16 %v513
    %v810 = vunpack.c.l.b16 %v514
    %v811 = vunpack.c.h.b16 %v514
    %v812 = vunpack.c.l.b16 %v515
    %v813 = vunpack.c.h.b16 %v515
    %v814 = vunpack.c.l.b16 %v516
    %v815 = vunpack.c.h.b16 %v516
    %v816 = vunpack.c.l.b16 %v517
    %v817 = vunpack.c.h.b16 %v517
    %v818 = vunpack.c.l.b16 %v518
    %v819 = vunpack.c.h.b16 %v518
    %v820 = vunpack.c.l.b16 %v519
    %v821 = vunpack.c.h.b16 %v519
    %v822 = vunpack.c.l.b16 %v520
    %v823 = vunpack.c.h.b16 %v520
    %v824 = vunpack.c.l.b16 %v521
    %v825 = vunpack.c.h.b16 %v521
    %v826 = vunpack.c.l.b16 %v522
    %v827 = vunpack.c.h.b16 %v522
    %v828 = vunpack.c.l.b16 %v523
    %v829 = vunpack.c.h.b16 %v523
    %v830 = vunpack.c.l.b16 %v524
    %v831 = vunpack.c.h.b16 %v524
    %v832 = vunpack.c.l.b16 %v525
    %v833 = vunpack.c.h.b16 %v525
    %v834 = vunpack.c.l.b16 %v526
    %v835 = vunpack.c.h.b16 %v526
    %v836 = vunpack.c.l.b16 %v527
    %v837 = vunpack.c.h.b16 %v527
    %v838 = vunpack.c.l.b16 %v528
    %v839 = vunpack.c.h.b16 %v528
    %v840 = vunpack.c.l.b16 %v529
    %v841 = vunpack.c.h.b16 %v529
    %v842 = vunpack.c.l.b16 %v530
    %v843 = vunpack.c.h.b16 %v530
    %v844 = vunpack.c.l.b16 %v531
    %v845 = vunpack.c.h.b16 %v531
    %v846 = vunpack.c.l.b16 %v532
    %v847 = vunpack.c.h.b16 %v532
    %v848 = vunpack.c.l.b16 %v533
    %v849 = vunpack.c.h.b16 %v533
    %v850 = vunpack.c.l.b16 %v534
    %v851 = vunpack.c.h.b16 %v534
    %v852 = vunpack.c.l.b16 %v535
    %v853 = vunpack.c.h.b16 %v535
    %v854 = vunpack.c.l.b16 %v536
    %v855 = vunpack.c.h.b16 %v536
    %v856 = vunpack.c.l.b16 %v537
    %v857 = vunpack.c.h.b16 %v537
    %v858 = vunpack.c.l.b16 %v538
    %v859 = vunpack.c.h.b16 %v538
    %v860 = vunpack.c.l.b16 %v539
    %v861 = vunpack.c.h.b16 %v539
    %v862 = vunpack.c.l.b16 %v540
    %v863 = vunpack.c.h.b16 %v540
    %v864 = vunpack.c.l.b16 %v541
    %v865 = vunpack.c.h.b16 %v541
    %v866 = vunpack.c.l.b16 %v542
    %v867 = vunpack.c.h.b16 %v542
    %v868 = vunpack.c.l.b16 %v543
    %v869 = vunpack.c.h.b16 %v543
    %v870 = vunpack.c.l.b16 %v544
    %v871 = vunpack.c.h.b16 %v544
    %v872 = vunpack.c.l.b16 %v545
    %v873 = vunpack.c.h.b16 %v545
    %v874 = vunpack.c.l.b16 %v546
    %v875 = vunpack.c.h.b16 %v546
    %v876 = vunpack.c.l.b16 %v547
    %v877 = vunpack.c.h.b16 %v547
    %v878 = vunpack.c.l.b16 %v548
    %v879 = vunpack.c.h.b16 %v548
    %v880 = vunpack.c.l.b16 %v549
    %v881 = vunpack.c.h.b16 %v549
    %v882 = vunpack.c.l.b16 %v550
    %v883 = vunpack.c.h.b16 %v550
    %v884 = vunpack.c.l.b16 %v551
    %v885 = vunpack.c.h.b16 %v551
    %v886 = vunpack.c.l.b16 %v552
    %v887 = vunpack.c.h.b16 %v552
    %v888 = vunpack.c.l.b16 %v553
    %v889 = vunpack.c.h.b16 %v553
    %v890 = vunpack.c.l.b16 %v554
    %v891 = vunpack.c.h.b16 %v554
    %v892 = vunpack.c.l.b16 %v555
    %v893 = vunpack.c.h.b16 %v555
    %v894 = vunpack.c.l.b16 %v556
    %v895 = vunpack.c.h.b16 %v556
    %v896 = vunpack.c.l.b16 %v557
    %v897 = vunpack.c.h.b16 %v557
    %v898 = vunpack.c.l.b16 %v558
    %v899 = vunpack.c.h.b16 %v558
    %v900 = vunpack.c.l.b16 %v559
    %v901 = vunpack.c.h.b16 %v559
    %v902 = vunpack.c.l.b16 %v560
    %v903 = vunpack.c.h.b16 %v560
    %v904 = vunpack.c.l.b16 %v561
    %v905 = vunpack.c.h.b16 %v561
    %v906 = vunpack.c.l.b16 %v562
    %v907 = vunpack.c.h.b16 %v562
    %v908 = vunpack.c.l.b16 %v563
    %v909 = vunpack.c.h.b16 %v563
    %v910 = vunpack.c.l.b16 %v564
    %v911 = vunpack.c.h.b16 %v564
    %v912 = vunpack.c.l.b16 %v565
    %v913 = vunpack.c.h.b16 %v565
    %v914 = vunpack.c.l.b16 %v566
    %v915 = vunpack.c.h.b16 %v566
    %v916 = vunpack.c.l.b16 %v567
    %v917 = vunpack.c.h.b16 %v567
    %v918 = vunpack.c.l.b16 %v568
    %v919 = vunpack.c.h.b16 %v568
    %v920 = vunpack.c.l.b16 %v569
    %v921 = vunpack.c.h.b16 %v569
    %v922 = vunpack.c.l.b16 %v570
    %v923 = vunpack.c.h.b16 %v570
    %v924 = vunpack.c.l.b16 %v571
    %v925 = vunpack.c.h.b16 %v571
    %v926 = vunpack.c.l.b16 %v572
    %v927 = vunpack.c.h.b16 %v572
    %v928 = vunpack.c.l.b16 %v573
    %v929 = vunpack.c.h.b16 %v573
    %v930 = vunpack.c.l.b16 %v574
    %v931 = vunpack.c.h.b16 %v574
    %v932 = vunpack.c.l.b16 %v575
    %v933 = vunpack.c.h.b16 %v575
    %v934 = vunpack.c.l.b16 %v576
    %v935 = vunpack.c.h.b16 %v576
    %v936 = vunpack.c.l.b16 %v577
    %v937 = vunpack.c.h.b16 %v577
    %v938 = vunpack.c.l.b16 %v578
    %v939 = vunpack.c.h.b16 %v578
    %v940 = vunpack.c.l.b16 %v579
    %v941 = vunpack.c.h.b16 %v579
    %v942 = vunpack.c.l.b16 %v580
    %v943 = vunpack.c.h.b16 %v580
    %v944 = vunpack.c.l.b16 %v581
    %v945 = vunpack.c.h.b16 %v581
    %v946 = vunpack.c.l.b16 %v582
    %v947 = vunpack.c.h.b16 %v582
    %v948 = vunpack.c.l.b16 %v583
    %v949 = vunpack.c.h.b16 %v583
    %v950 = vunpack.c.l.b16 %v584
    %v951 = vunpack.c.h.b16 %v584
    %v952 = vunpack.c.l.b16 %v585
    %v953 = vunpack.c.h.b16 %v585
    %v954 = vunpack.c.l.b16 %v586
    %v955 = vunpack.c.h.b16 %v586
    %v956 = vunpack.c.l.b16 %v587
    %v957 = vunpack.c.h.b16 %v587
    %v958 = vunpack.c.l.b16 %v588
    %v959 = vunpack.c.h.b16 %v588
    %v960 = vunpack.c.l.b16 %v589
    %v961 = vunpack.c.h.b16 %v589
    %v962 = vunpack.c.l.b16 %v590
    %v963 = vunpack.c.h.b16 %v590
    %v964 = vunpack.c.l.b16 %v591
    %v965 = vunpack.c.h.b16 %v591
    %v966 = vunpack.c.l.b16 %v592
    %v967 = vunpack.c.h.b16 %v592
    %v968 = vunpack.c.l.b16 %v593
    %v969 = vunpack.c.h.b16 %v593
    %v970 = vunpack.c.l.b16 %v594
    %v971 = vunpack.c.h.b16 %v594
    %v972 = vunpack.c.l.b16 %v595
    %v973 = vunpack.c.h.b16 %v595
    %v974 = vunpack.c.l.b16 %v596
    %v975 = vunpack.c.h.b16 %v596
    %v976 = vunpack.c.l.b16 %v597
    %v977 = vunpack.c.h.b16 %v597
    %v978 = vunpack.c.l.b16 %v598
    %v979 = vunpack.c.h.b16 %v598
    %v980 = vunpack.c.l.b16 %v599
    %v981 = vunpack.c.h.b16 %v599
    %v982 = vunpack.c.l.b16 %v600
    %v983 = vunpack.c.h.b16 %v600
    %v984 = vunpack.c.l.b16 %v601
    %v985 = vunpack.c.h.b16 %v601
    %v986 = vunpack.c.l.b16 %v602
    %v987 = vunpack.c.h.b16 %v602
    %v988 = vunpack.c.l.b16 %v603
    %v989 = vunpack.c.h.b16 %v603
    %v990 = vunpack.c.l.b16 %v604
    %v991 = vunpack.c.h.b16 %v604
    %v992 = vunpack.c.l.b16 %v605
    %v993 = vunpack.c.h.b16 %v605
    %v994 = vunpack.c.l.b16 %v606
    %v995 = vunpack.c.h.b16 %v606
    %v996 = vunpack.c.l.b16 %v607
    %v997 = vunpack.c.h.b16 %v607
    %v998 = vunpack.c.l.b16 %v608
    %v999 = vunpack.c.h.b16 %v608
    %v1000 = vunpack.c.l.b16 %v609
    %v1001 = vunpack.c.h.b16 %v609
    %v1002 = vunpack.c.l.b16 %v610
    %v1003 = vunpack.c.h.b16 %v610
    %v1004 = vunpack.c.l.b16 %v611
    %v1005 = vunpack.c.h.b16 %v611
    %v1006 = vunpack.c.l.b16 %v612
    %v1007 = vunpack.c.h.b16 %v612
    %v1008 = vunpack.c.l.b16 %v613
    %v1009 = vunpack.c.h.b16 %v613
    %v1010 = vunpack.c.l.b16 %v614
    %v1011 = vunpack.c.h.b16 %v614
    %v1012 = vunpack.c.l.b16 %v615
    %v1013 = vunpack.c.h.b16 %v615
    %v1014 = vunpack.c.l.b16 %v616
    %v1015 = vunpack.c.h.b16 %v616
    %v1016 = vunpack.c.l.b16 %v617
    %v1017 = vunpack.c.h.b16 %v617
    %v1018 = vunpack.c.l.b16 %v618
    %v1019 = vunpack.c.h.b16 %v618
    %v1020 = vunpack.c.l.b16 %v619
    %v1021 = vunpack.c.h.b16 %v619
    %v1022 = vunpack.c.l.b16 %v620
    %v1023 = vunpack.c.h.b16 %v620
    %v1024 = vunpack.c.l.b16 %v621
    %v1025 = vunpack.c.h.b16 %v621
    %v1026 = vunpack.c.l.b16 %v622
    %v1027 = vunpack.c.h.b16 %v622
    %v1028 = vunpack.c.l.b16 %v623
    %v1029 = vunpack.c.h.b16 %v623
    %v1030 = vpack.c.b16 %v778, %v774
    %v1031 = vpack.c.b16 %v779, %v775
    %v1032 = vpack.c.b16 %v780, %v776
    %v1033 = vpack.c.b16 %v781, %v777
    %v1034 = vpack.c.b16 %v786, %v782
    %v1035 = vpack.c.b16 %v787, %v783
    %v1036 = vpack.c.b16 %v788, %v784
    %v1037 = vpack.c.b16 %v789, %v785
    %v1038 = vpack.c.b16 %v794, %v790
    %v1039 = vpack.c.b16 %v795, %v791
    %v1040 = vpack.c.b16 %v796, %v792
    %v1041 = vpack.c.b16 %v797, %v793
    %v1042 = vpack.c.b16 %v802, %v798
    %v1043 = vpack.c.b16 %v803, %v799
    %v1044 = vpack.c.b16 %v804, %v800
    %v1045 = vpack.c.b16 %v805, %v801
    %v1046 = vpack.c.b16 %v810, %v806
    %v1047 = vpack.c.b16 %v811, %v807
    %v1048 = vpack.c.b16 %v812, %v808
    %v1049 = vpack.c.b16 %v813, %v809
    %v1050 = vpack.c.b16 %v818, %v814
    %v1051 = vpack.c.b16 %v819, %v815
    %v1052 = vpack.c.b16 %v820, %v816
    %v1053 = vpack.c.b16 %v821, %v817
    %v1054 = vpack.c.b16 %v826, %v822
    %v1055 = vpack.c.b16 %v827, %v823
    %v1056 = vpack.c.b16 %v828, %v824
    %v1057 = vpack.c.b16 %v829, %v825
    %v1058 = vpack.c.b16 %v834, %v830
    %v1059 = vpack.c.b16 %v835, %v831
    %v1060 = vpack.c.b16 %v836, %v832
    %v1061 = vpack.c.b16 %v837, %v833
    %v1062 = vpack.c.b16 %v842, %v838
    %v1063 = vpack.c.b16 %v843, %v839
    %v1064 = vpack.c.b16 %v844, %v840
    %v1065 = vpack.c.b16 %v845, %v841
    %v1066 = vpack.c.b16 %v850, %v846
    %v1067 = vpack.c.b16 %v851, %v847
    %v1068 = vpack.c.b16 %v852, %v848
    %v1069 = vpack.c.b16 %v853, %v849
    %v1070 = vpack.c.b16 %v858, %v854
    %v1071 = vpack.c.b16 %v859, %v855
    %v1072 = vpack.c.b16 %v860, %v856
    %v1073 = vpack.c.b16 %v861, %v857
    %v1074 = vpack.c.b16 %v866, %v862
    %v1075 = vpack.c.b16 %v867, %v863
    %v1076 = vpack.c.b16 %v868, %v864
    %v1077 = vpack.c.b16 %v869, %v865
    %v1078 = vpack.c.b16 %v874, %v870
    %v1079 = vpack.c.b16 %v875, %v871
    %v1080 = vpack.c.b16 %v876, %v872
    %v1081 = vpack.c.b16 %v877, %v873
    %v1082 = vpack.c.b16 %v882, %v878
    %v1083 = vpack.c.b16 %v883, %v879
    %v1084 = vpack.c.b16 %v884, %v880
    %v1085 = vpack.c.b16 %v885, %v881
    %v1086 = vpack.c.b16 %v890, %v886
    %v1087 = vpack.c.b16 %v891, %v887
    %v1088 = vpack.c.b16 %v892, %v888
    %v1089 = vpack.c.b16 %v893, %v889
    %v1090 = vpack.c.b16 %v898, %v894
    %v1091 = vpack.c.b16 %v899, %v895
    %v1092 = vpack.c.b16 %v900, %v896
    %v1093 = vpack.c.b16 %v901, %v897
    %v1094 = vpack.c.b16 %v906, %v902
    %v1095 = vpack.c.b16 %v907, %v903
    %v1096 = vpack.c.b16 %v908, %v904
    %v1097 = vpack.c.b16 %v909, %v905
    %v1098 = vpack.c.b16 %v914, %v910
    %v1099 = vpack.c.b16 %v915, %v911
    %v1100 = vpack.c.b16 %v916, %v912
    %v1101 = vpack.c.b16 %v917, %v913
    %v1102 = vpack.c.b16 %v922, %v918
    %v1103 = vpack.c.b16 %v923, %v919
    %v1104 = vpack.c.b16 %v924, %v920
    %v1105 = vpack.c.b16 %v925, %v921
    %v1106 = vpack.c.b16 %v930, %v926
    %v1107 = vpack.c.b16 %v931, %v927
    %v1108 = vpack.c.b16 %v932, %v928
    %v1109 = vpack.c.b16 %v933, %v929
    %v1110 = vpack.c.b16 %v938, %v934
    %v1111 = vpack.c.b16 %v939, %v935
    %v1112 = vpack.c.b16 %v940, %v936
    %v1113 = vpack.c.b16 %v941, %v937
    %v1114 = vpack.c.b16 %v946, %v942
    %v1115 = vpack.c.b16 %v947, %v943
    %v1116 = vpack.c.b16 %v948, %v944
    %v1117 = vpack.c.b16 %v949, %v945
    %v1118 = vpack.c.b16 %v954, %v950
    %v1119 = vpack.c.b16 %v955, %v951
    %v1120 = vpack.c.b16 %v956, %v952
    %v1121 = vpack.c.b16 %v957, %v953
    %v1122 = vpack.c.b16 %v962, %v958
    %v1123 = vpack.c.b16 %v963, %v959
    %v1124 = vpack.c.b16 %v964, %v960
    %v1125 = vpack.c.b16 %v965, %v961
    %v1126 = vpack.c.b16 %v970, %v966
    %v1127 = vpack.c.b16 %v971, %v967
    %v1128 = vpack.c.b16 %v972, %v968
    %v1129 = vpack.c.b16 %v973, %v969
    %v1130 = vpack.c.b16 %v978, %v974
    %v1131 = vpack.c.b16 %v979, %v975
    %v1132 = vpack.c.b16 %v980, %v976
    %v1133 = vpack.c.b16 %v981, %v977
    %v1134 = vpack.c.b16 %v986, %v982
    %v1135 = vpack.c.b16 %v987, %v983
    %v1136 = vpack.c.b16 %v988, %v984
    %v1137 = vpack.c.b16 %v989, %v985
    %v1138 = vpack.c.b16 %v994, %v990
    %v1139 = vpack.c.b16 %v995, %v991
    %v1140 = vpack.c.b16 %v996, %v992
    %v1141 = vpack.c.b16 %v997, %v993
    %v1142 = vpack.c.b16 %v1002, %v998
    %v1143 = vpack.c.b16 %v1003, %v999
    %v1144 = vpack.c.b16 %v1004, %v1000
    %v1145 = vpack.c.b16 %v1005, %v1001
    %v1146 = vpack.c.b16 %v1010, %v1006
    %v1147 = vpack.c.b16 %v1011, %v1007
    %v1148 = vpack.c.b16 %v1012, %v1008
    %v1149 = vpack.c.b16 %v1013, %v1009
    %v1150 = vpack.c.b16 %v1018, %v1014
    %v1151 = vpack.c.b16 %v1019, %v1015
    %v1152 = vpack.c.b16 %v1020, %v1016
    %v1153 = vpack.c.b16 %v1021, %v1017
    %v1154 = vpack.c.b16 %v1026, %v1022
    %v1155 = vpack.c.b16 %v1027, %v1023
    %v1156 = vpack.c.b16 %v1028, %v1024
    %v1157 = vpack.c.b16 %v1029, %v1025
    %1286 = vmatprep.subr.bf16.mxu0 %v1031
    %1287 = vmatpush1.bf16.msra.mxu0 %v1030
    %1288 = vmatprep.subr.bf16.mxu0 %v1035
    %1289 = vmatpush1.bf16.msra.mxu0 %v1034
    %1290 = vmatprep.subr.bf16.mxu0 %v1039
    %1291 = vmatpush1.bf16.msra.mxu0 %v1038
    %1292 = vmatprep.subr.bf16.mxu0 %v1043
    %1293 = vmatpush1.bf16.msra.mxu0 %v1042
    %1294 = vmatprep.subr.bf16.mxu0 %v1047
    %1295 = vmatpush1.bf16.msra.mxu0 %v1046
    %1296 = vmatprep.subr.bf16.mxu0 %v1051
    %1297 = vmatpush1.bf16.msra.mxu0 %v1050
    %1298 = vmatprep.subr.bf16.mxu0 %v1055
    %1299 = vmatpush1.bf16.msra.mxu0 %v1054
    %1300 = vmatprep.subr.bf16.mxu0 %v1059
    %1301 = vmatpush1.bf16.msra.mxu0 %v1058
    %1302 = vmatprep.subr.bf16.mxu0 %v1063
    %1303 = vmatpush1.bf16.msra.mxu0 %v1062
    %1304 = vmatprep.subr.bf16.mxu0 %v1067
    %1305 = vmatpush1.bf16.msra.mxu0 %v1066
    %1306 = vmatprep.subr.bf16.mxu0 %v1071
    %1307 = vmatpush1.bf16.msra.mxu0 %v1070
    %1308 = vmatprep.subr.bf16.mxu0 %v1075
    %1309 = vmatpush1.bf16.msra.mxu0 %v1074
    %1310 = vmatprep.subr.bf16.mxu0 %v1079
    %1311 = vmatpush1.bf16.msra.mxu0 %v1078
    %1312 = vmatprep.subr.bf16.mxu0 %v1083
    %1313 = vmatpush1.bf16.msra.mxu0 %v1082
    %1314 = vmatprep.subr.bf16.mxu0 %v1087
    %1315 = vmatpush1.bf16.msra.mxu0 %v1086
    %1316 = vmatprep.subr.bf16.mxu0 %v1091
    %1317 = vmatpush1.bf16.msra.mxu0 %v1090
    %1318 = vmatprep.mubr.bf16.mxu0 %v465
    %1319 = vmatmul.mubr.bf16.gmra.mrb[0].mxu0 %v464
    %v1320 = vpop.f32.mrb[0].mxu0
    %v1321 = vadd.f32 %v629, %v1320
    %v1322 = vpop.f32.mrb[0].mxu0
    %v1323 = vadd.f32 %v633, %v1322
    %v1324 = vpop.f32.mrb[0].mxu0
    %v1325 = vadd.f32 %v629, %v1324
    %v1326 = vpop.f32.mrb[0].mxu0
    %v1327 = vadd.f32 %v633, %v1326
    %1328 = vmatprep.mubr.bf16.mxu0 %v469
    %1329 = vmatmul.mubr.bf16.gmra.mrb[0].mxu0 %v468
    %v1330 = vpop.f32.mrb[0].mxu0
    %v1331 = vadd.f32 %v629, %v1330
    %v1332 = vpop.f32.mrb[0].mxu0
    %v1333 = vadd.f32 %v633, %v1332
    %v1334 = vpop.f32.mrb[0].mxu0
    %v1335 = vadd.f32 %v629, %v1334
    %v1336 = vpop.f32.mrb[0].mxu0
    %v1337 = vadd.f32 %v633, %v1336
    %1338 = vmatprep.mubr.bf16.mxu0 %v473
    %1339 = vmatmul.mubr.bf16.gmra.mrb[0].mxu0 %v472
    %v1340 = vpop.f32.mrb[0].mxu0
    %v1341 = vadd.f32 %v629, %v1340
    %v1342 = vpop.f32.mrb[0].mxu0
    %v1343 = vadd.f32 %v633, %v1342
    %v1344 = vpop.f32.mrb[0].mxu0
    %v1345 = vadd.f32 %v629, %v1344
    %v1346 = vpop.f32.mrb[0].mxu0
    %v1347 = vadd.f32 %v633, %v1346
    %1348 = vmatprep.mubr.bf16.mxu0 %v477
    %1349 = vmatmul.mubr.bf16.gmra.mrb[0].mxu0 %v476
    %v1350 = vpop.f32.mrb[0].mxu0
    %v1351 = vadd.f32 %v629, %v1350
    %v1352 = vpop.f32.mrb[0].mxu0
    %v1353 = vadd.f32 %v633, %v1352
    %v1354 = vpop.f32.mrb[0].mxu0
    %v1355 = vadd.f32 %v629, %v1354
    %v1356 = vpop.f32.mrb[0].mxu0
    %v1357 = vadd.f32 %v633, %v1356
    %1358 = vmatprep.mubr.bf16.mxu0 %v481
    %1359 = vmatmul.mubr.bf16.gmra.mrb[0].mxu0 %v480
    %v1360 = vpop.f32.mrb[0].mxu0
    %v1361 = vadd.f32 %v629, %v1360
    %v1362 = vpop.f32.mrb[0].mxu0
    %v1363 = vadd.f32 %v633, %v1362
    %v1364 = vpop.f32.mrb[0].mxu0
    %v1365 = vadd.f32 %v629, %v1364
    %v1366 = vpop.f32.mrb[0].mxu0
    %v1367 = vadd.f32 %v633, %v1366
    %1368 = vmatprep.mubr.bf16.mxu0 %v485
    %1369 = vmatmul.mubr.bf16.gmra.mrb[0].mxu0 %v484
    %v1370 = vpop.f32.mrb[0].mxu0
    %v1371 = vadd.f32 %v629, %v1370
    %v1372 = vpop.f32.mrb[0].mxu0
    %v1373 = vadd.f32 %v633, %v1372
    %v1374 = vpop.f32.mrb[0].mxu0
    %v1375 = vadd.f32 %v629, %v1374
    %v1376 = vpop.f32.mrb[0].mxu0
    %v1377 = vadd.f32 %v633, %v1376
    %1378 = vmatprep.mubr.bf16.mxu0 %v489
    %1379 = vmatmul.mubr.bf16.gmra.mrb[0].mxu0 %v488
    %v1380 = vpop.f32.mrb[0].mxu0
    %v1381 = vadd.f32 %v629, %v1380
    %v1382 = vpop.f32.mrb[0].mxu0
    %v1383 = vadd.f32 %v633, %v1382
    %v1384 = vpop.f32.mrb[0].mxu0
    %v1385 = vadd.f32 %v629, %v1384
    %v1386 = vpop.f32.mrb[0].mxu0
    %v1387 = vadd.f32 %v633, %v1386
    %1388 = vmatprep.mubr.bf16.mxu0 %v493
    %1389 = vmatmul.mubr.bf16.gmra.mrb[0].mxu0 %v492
    %v1390 = vpop.f32.mrb[0].mxu0
    %v1391 = vadd.f32 %v629, %v1390
    %v1392 = vpop.f32.mrb[0].mxu0
    %v1393 = vadd.f32 %v633, %v1392
    %v1394 = vpop.f32.mrb[0].mxu0
    %v1395 = vadd.f32 %v629, %v1394
    %v1396 = vpop.f32.mrb[0].mxu0
    %v1397 = vadd.f32 %v633, %v1396
    %1398 = vdwg.mxu0
    %1399 = vmatprep.subr.bf16.mxu0 %v1095
    %1400 = vmatpush1.bf16.msra.mxu0 %v1094
    %1401 = vmatprep.subr.bf16.mxu0 %v1099
    %1402 = vmatpush1.bf16.msra.mxu0 %v1098
    %1403 = vmatprep.subr.bf16.mxu0 %v1103
    %1404 = vmatpush1.bf16.msra.mxu0 %v1102
    %1405 = vmatprep.subr.bf16.mxu0 %v1107
    %1406 = vmatpush1.bf16.msra.mxu0 %v1106
    %1407 = vmatprep.subr.bf16.mxu0 %v1111
    %1408 = vmatpush1.bf16.msra.mxu0 %v1110
    %1409 = vmatprep.subr.bf16.mxu0 %v1115
    %1410 = vmatpush1.bf16.msra.mxu0 %v1114
    %1411 = vmatprep.subr.bf16.mxu0 %v1119
    %1412 = vmatpush1.bf16.msra.mxu0 %v1118
    %1413 = vmatprep.subr.bf16.mxu0 %v1123
    %1414 = vmatpush1.bf16.msra.mxu0 %v1122
    %1415 = vmatprep.subr.bf16.mxu0 %v1127
    %1416 = vmatpush1.bf16.msra.mxu0 %v1126
    %1417 = vmatprep.subr.bf16.mxu0 %v1131
    %1418 = vmatpush1.bf16.msra.mxu0 %v1130
    %1419 = vmatprep.subr.bf16.mxu0 %v1135
    %1420 = vmatpush1.bf16.msra.mxu0 %v1134
    %1421 = vmatprep.subr.bf16.mxu0 %v1139
    %1422 = vmatpush1.bf16.msra.mxu0 %v1138
    %1423 = vmatprep.subr.bf16.mxu0 %v1143
    %1424 = vmatpush1.bf16.msra.mxu0 %v1142
    %1425 = vmatprep.subr.bf16.mxu0 %v1147
    %1426 = vmatpush1.bf16.msra.mxu0 %v1146
    %1427 = vmatprep.subr.bf16.mxu0 %v1151
    %1428 = vmatpush1.bf16.msra.mxu0 %v1150
    %1429 = vmatprep.subr.bf16.mxu0 %v1155
    %1430 = vmatpush1.bf16.msra.mxu0 %v1154
    %1431 = vmatprep.mubr.bf16.mxu0 %v467
    %1432 = vmatmul.mubr.bf16.gmra.mrb[0].mxu0 %v466
    %v1433 = vpop.f32.mrb[0].mxu0
    %v1434 = vadd.f32 %v1321, %v1433
    %v1435 = vpop.f32.mrb[0].mxu0
    %v1436 = vadd.f32 %v1323, %v1435
    %v1437 = vpop.f32.mrb[0].mxu0
    %v1438 = vadd.f32 %v1325, %v1437
    %v1439 = vpop.f32.mrb[0].mxu0
    %v1440 = vadd.f32 %v1327, %v1439
    %1441 = vmatprep.mubr.bf16.mxu0 %v471
    %1442 = vmatmul.mubr.bf16.gmra.mrb[0].mxu0 %v470
    %v1443 = vpop.f32.mrb[0].mxu0
    %v1444 = vadd.f32 %v1331, %v1443
    %v1445 = vpop.f32.mrb[0].mxu0
    %v1446 = vadd.f32 %v1333, %v1445
    %v1447 = vpop.f32.mrb[0].mxu0
    %v1448 = vadd.f32 %v1335, %v1447
    %v1449 = vpop.f32.mrb[0].mxu0
    %v1450 = vadd.f32 %v1337, %v1449
    %1451 = vmatprep.mubr.bf16.mxu0 %v475
    %1452 = vmatmul.mubr.bf16.gmra.mrb[0].mxu0 %v474
    %v1453 = vpop.f32.mrb[0].mxu0
    %v1454 = vadd.f32 %v1341, %v1453
    %v1455 = vpop.f32.mrb[0].mxu0
    %v1456 = vadd.f32 %v1343, %v1455
    %v1457 = vpop.f32.mrb[0].mxu0
    %v1458 = vadd.f32 %v1345, %v1457
    %v1459 = vpop.f32.mrb[0].mxu0
    %v1460 = vadd.f32 %v1347, %v1459
    %1461 = vmatprep.mubr.bf16.mxu0 %v479
    %1462 = vmatmul.mubr.bf16.gmra.mrb[0].mxu0 %v478
    %v1463 = vpop.f32.mrb[0].mxu0
    %v1464 = vadd.f32 %v1351, %v1463
    %v1465 = vpop.f32.mrb[0].mxu0
    %v1466 = vadd.f32 %v1353, %v1465
    %v1467 = vpop.f32.mrb[0].mxu0
    %v1468 = vadd.f32 %v1355, %v1467
    %v1469 = vpop.f32.mrb[0].mxu0
    %v1470 = vadd.f32 %v1357, %v1469
    %1471 = vmatprep.mubr.bf16.mxu0 %v483
    %1472 = vmatmul.mubr.bf16.gmra.mrb[0].mxu0 %v482
    %v1473 = vpop.f32.mrb[0].mxu0
    %v1474 = vadd.f32 %v1361, %v1473
    %v1475 = vpop.f32.mrb[0].mxu0
    %v1476 = vadd.f32 %v1363, %v1475
    %v1477 = vpop.f32.mrb[0].mxu0
    %v1478 = vadd.f32 %v1365, %v1477
    %v1479 = vpop.f32.mrb[0].mxu0
    %v1480 = vadd.f32 %v1367, %v1479
    %1481 = vmatprep.mubr.bf16.mxu0 %v487
    %1482 = vmatmul.mubr.bf16.gmra.mrb[0].mxu0 %v486
    %v1483 = vpop.f32.mrb[0].mxu0
    %v1484 = vadd.f32 %v1371, %v1483
    %v1485 = vpop.f32.mrb[0].mxu0
    %v1486 = vadd.f32 %v1373, %v1485
    %v1487 = vpop.f32.mrb[0].mxu0
    %v1488 = vadd.f32 %v1375, %v1487
    %v1489 = vpop.f32.mrb[0].mxu0
    %v1490 = vadd.f32 %v1377, %v1489
    %1491 = vmatprep.mubr.bf16.mxu0 %v491
    %1492 = vmatmul.mubr.bf16.gmra.mrb[0].mxu0 %v490
    %v1493 = vpop.f32.mrb[0].mxu0
    %v1494 = vadd.f32 %v1381, %v1493
    %v1495 = vpop.f32.mrb[0].mxu0
    %v1496 = vadd.f32 %v1383, %v1495
    %v1497 = vpop.f32.mrb[0].mxu0
    %v1498 = vadd.f32 %v1385, %v1497
    %v1499 = vpop.f32.mrb[0].mxu0
    %v1500 = vadd.f32 %v1387, %v1499
    %1501 = vmatprep.mubr.bf16.mxu0 %v495
    %1502 = vmatmul.mubr.bf16.gmra.mrb[0].mxu0 %v494
    %v1503 = vpop.f32.mrb[0].mxu0
    %v1504 = vadd.f32 %v1391, %v1503
    %v1505 = vpop.f32.mrb[0].mxu0
    %v1506 = vadd.f32 %v1393, %v1505
    %v1507 = vpop.f32.mrb[0].mxu0
    %v1508 = vadd.f32 %v1395, %v1507
    %v1509 = vpop.f32.mrb[0].mxu0
    %v1510 = vadd.f32 %v1397, %v1509
    %1511 = vdwg.mxu0
    %1512 = vmatprep.subr.bf16.mxu0 %v1033
    %1513 = vmatpush1.bf16.msra.mxu0 %v1032
    %1514 = vmatprep.subr.bf16.mxu0 %v1037
    %1515 = vmatpush1.bf16.msra.mxu0 %v1036
    %1516 = vmatprep.subr.bf16.mxu0 %v1041
    %1517 = vmatpush1.bf16.msra.mxu0 %v1040
    %1518 = vmatprep.subr.bf16.mxu0 %v1045
    %1519 = vmatpush1.bf16.msra.mxu0 %v1044
    %1520 = vmatprep.subr.bf16.mxu0 %v1049
    %1521 = vmatpush1.bf16.msra.mxu0 %v1048
    %1522 = vmatprep.subr.bf16.mxu0 %v1053
    %1523 = vmatpush1.bf16.msra.mxu0 %v1052
    %1524 = vmatprep.subr.bf16.mxu0 %v1057
    %1525 = vmatpush1.bf16.msra.mxu0 %v1056
    %1526 = vmatprep.subr.bf16.mxu0 %v1061
    %1527 = vmatpush1.bf16.msra.mxu0 %v1060
    %1528 = vmatprep.subr.bf16.mxu0 %v1065
    %1529 = vmatpush1.bf16.msra.mxu0 %v1064
    %1530 = vmatprep.subr.bf16.mxu0 %v1069
    %1531 = vmatpush1.bf16.msra.mxu0 %v1068
    %1532 = vmatprep.subr.bf16.mxu0 %v1073
    %1533 = vmatpush1.bf16.msra.mxu0 %v1072
    %1534 = vmatprep.subr.bf16.mxu0 %v1077
    %1535 = vmatpush1.bf16.msra.mxu0 %v1076
    %1536 = vmatprep.subr.bf16.mxu0 %v1081
    %1537 = vmatpush1.bf16.msra.mxu0 %v1080
    %1538 = vmatprep.subr.bf16.mxu0 %v1085
    %1539 = vmatpush1.bf16.msra.mxu0 %v1084
    %1540 = vmatprep.subr.bf16.mxu0 %v1089
    %1541 = vmatpush1.bf16.msra.mxu0 %v1088
    %1542 = vmatprep.subr.bf16.mxu0 %v1093
    %1543 = vmatpush1.bf16.msra.mxu0 %v1092
    %1544 = vmatprep.mubr.bf16.mxu0 %v465
    %1545 = vmatmul.mubr.bf16.gmra.mrb[0].mxu0 %v464
    %v1546 = vpop.f32.mrb[0].mxu0
    %v1547 = vadd.f32 %v637, %v1546
    %v1548 = vpop.f32.mrb[0].mxu0
    %v1549 = vadd.f32 %v641, %v1548
    %v1550 = vpop.f32.mrb[0].mxu0
    %v1551 = vadd.f32 %v637, %v1550
    %v1552 = vpop.f32.mrb[0].mxu0
    %v1553 = vadd.f32 %v641, %v1552
    %1554 = vmatprep.mubr.bf16.mxu0 %v469
    %1555 = vmatmul.mubr.bf16.gmra.mrb[0].mxu0 %v468
    %v1556 = vpop.f32.mrb[0].mxu0
    %v1557 = vadd.f32 %v637, %v1556
    %v1558 = vpop.f32.mrb[0].mxu0
    %v1559 = vadd.f32 %v641, %v1558
    %v1560 = vpop.f32.mrb[0].mxu0
    %v1561 = vadd.f32 %v637, %v1560
    %v1562 = vpop.f32.mrb[0].mxu0
    %v1563 = vadd.f32 %v641, %v1562
    %1564 = vmatprep.mubr.bf16.mxu0 %v473
    %1565 = vmatmul.mubr.bf16.gmra.mrb[0].mxu0 %v472
    %v1566 = vpop.f32.mrb[0].mxu0
    %v1567 = vadd.f32 %v637, %v1566
    %v1568 = vpop.f32.mrb[0].mxu0
    %v1569 = vadd.f32 %v641, %v1568
    %v1570 = vpop.f32.mrb[0].mxu0
    %v1571 = vadd.f32 %v637, %v1570
    %v1572 = vpop.f32.mrb[0].mxu0
    %v1573 = vadd.f32 %v641, %v1572
    %1574 = vmatprep.mubr.bf16.mxu0 %v477
    %1575 = vmatmul.mubr.bf16.gmra.mrb[0].mxu0 %v476
    %v1576 = vpop.f32.mrb[0].mxu0
    %v1577 = vadd.f32 %v637, %v1576
    %v1578 = vpop.f32.mrb[0].mxu0
    %v1579 = vadd.f32 %v641, %v1578
    %v1580 = vpop.f32.mrb[0].mxu0
    %v1581 = vadd.f32 %v637, %v1580
    %v1582 = vpop.f32.mrb[0].mxu0
    %v1583 = vadd.f32 %v641, %v1582
    %1584 = vmatprep.mubr.bf16.mxu0 %v481
    %1585 = vmatmul.mubr.bf16.gmra.mrb[0].mxu0 %v480
    %v1586 = vpop.f32.mrb[0].mxu0
    %v1587 = vadd.f32 %v637, %v1586
    %v1588 = vpop.f32.mrb[0].mxu0
    %v1589 = vadd.f32 %v641, %v1588
    %v1590 = vpop.f32.mrb[0].mxu0
    %v1591 = vadd.f32 %v637, %v1590
    %v1592 = vpop.f32.mrb[0].mxu0
    %v1593 = vadd.f32 %v641, %v1592
    %1594 = vmatprep.mubr.bf16.mxu0 %v485
    %1595 = vmatmul.mubr.bf16.gmra.mrb[0].mxu0 %v484
    %v1596 = vpop.f32.mrb[0].mxu0
    %v1597 = vadd.f32 %v637, %v1596
    %v1598 = vpop.f32.mrb[0].mxu0
    %v1599 = vadd.f32 %v641, %v1598
    %v1600 = vpop.f32.mrb[0].mxu0
    %v1601 = vadd.f32 %v637, %v1600
    %v1602 = vpop.f32.mrb[0].mxu0
    %v1603 = vadd.f32 %v641, %v1602
    %1604 = vmatprep.mubr.bf16.mxu0 %v489
    %1605 = vmatmul.mubr.bf16.gmra.mrb[0].mxu0 %v488
    %v1606 = vpop.f32.mrb[0].mxu0
    %v1607 = vadd.f32 %v637, %v1606
    %v1608 = vpop.f32.mrb[0].mxu0
    %v1609 = vadd.f32 %v641, %v1608
    %v1610 = vpop.f32.mrb[0].mxu0
    %v1611 = vadd.f32 %v637, %v1610
    %v1612 = vpop.f32.mrb[0].mxu0
    %v1613 = vadd.f32 %v641, %v1612
    %1614 = vmatprep.mubr.bf16.mxu0 %v493
    %1615 = vmatmul.mubr.bf16.gmra.mrb[0].mxu0 %v492
    %v1616 = vpop.f32.mrb[0].mxu0
    %v1617 = vadd.f32 %v637, %v1616
    %v1618 = vpop.f32.mrb[0].mxu0
    %v1619 = vadd.f32 %v641, %v1618
    %v1620 = vpop.f32.mrb[0].mxu0
    %v1621 = vadd.f32 %v637, %v1620
    %v1622 = vpop.f32.mrb[0].mxu0
    %v1623 = vadd.f32 %v641, %v1622
    %1624 = vdwg.mxu0
    %1625 = vmatprep.subr.bf16.mxu0 %v1097
    %1626 = vmatpush1.bf16.msra.mxu0 %v1096
    %1627 = vmatprep.subr.bf16.mxu0 %v1101
    %1628 = vmatpush1.bf16.msra.mxu0 %v1100
    %1629 = vmatprep.subr.bf16.mxu0 %v1105
    %1630 = vmatpush1.bf16.msra.mxu0 %v1104
    %1631 = vmatprep.subr.bf16.mxu0 %v1109
    %1632 = vmatpush1.bf16.msra.mxu0 %v1108
    %1633 = vmatprep.subr.bf16.mxu0 %v1113
    %1634 = vmatpush1.bf16.msra.mxu0 %v1112
    %1635 = vmatprep.subr.bf16.mxu0 %v1117
    %1636 = vmatpush1.bf16.msra.mxu0 %v1116
    %1637 = vmatprep.subr.bf16.mxu0 %v1121
    %1638 = vmatpush1.bf16.msra.mxu0 %v1120
    %1639 = vmatprep.subr.bf16.mxu0 %v1125
    %1640 = vmatpush1.bf16.msra.mxu0 %v1124
    %1641 = vmatprep.subr.bf16.mxu0 %v1129
    %1642 = vmatpush1.bf16.msra.mxu0 %v1128
    %1643 = vmatprep.subr.bf16.mxu0 %v1133
    %1644 = vmatpush1.bf16.msra.mxu0 %v1132
    %1645 = vmatprep.subr.bf16.mxu0 %v1137
    %1646 = vmatpush1.bf16.msra.mxu0 %v1136
    %1647 = vmatprep.subr.bf16.mxu0 %v1141
    %1648 = vmatpush1.bf16.msra.mxu0 %v1140
    %1649 = vmatprep.subr.bf16.mxu0 %v1145
    %1650 = vmatpush1.bf16.msra.mxu0 %v1144
    %1651 = vmatprep.subr.bf16.mxu0 %v1149
    %1652 = vmatpush1.bf16.msra.mxu0 %v1148
    %1653 = vmatprep.subr.bf16.mxu0 %v1153
    %1654 = vmatpush1.bf16.msra.mxu0 %v1152
    %1655 = vmatprep.subr.bf16.mxu0 %v1157
    %1656 = vmatpush1.bf16.msra.mxu0 %v1156
    %1657 = vmatprep.mubr.bf16.mxu0 %v467
    %1658 = vmatmul.mubr.bf16.gmra.mrb[0].mxu0 %v466
    %v1659 = vpop.f32.mrb[0].mxu0
    %v1660 = vadd.f32 %v1547, %v1659
    %v1661 = vpop.f32.mrb[0].mxu0
    %v1662 = vadd.f32 %v1549, %v1661
    %v1663 = vpop.f32.mrb[0].mxu0
    %v1664 = vadd.f32 %v1551, %v1663
    %v1665 = vpop.f32.mrb[0].mxu0
    %v1666 = vadd.f32 %v1553, %v1665
    %1667 = vmatprep.mubr.bf16.mxu0 %v471
    %1668 = vmatmul.mubr.bf16.gmra.mrb[0].mxu0 %v470
    %v1669 = vpop.f32.mrb[0].mxu0
    %v1670 = vadd.f32 %v1557, %v1669
    %v1671 = vpop.f32.mrb[0].mxu0
    %v1672 = vadd.f32 %v1559, %v1671
    %v1673 = vpop.f32.mrb[0].mxu0
    %v1674 = vadd.f32 %v1561, %v1673
    %v1675 = vpop.f32.mrb[0].mxu0
    %v1676 = vadd.f32 %v1563, %v1675
    %1677 = vmatprep.mubr.bf16.mxu0 %v475
    %1678 = vmatmul.mubr.bf16.gmra.mrb[0].mxu0 %v474
    %v1679 = vpop.f32.mrb[0].mxu0
    %v1680 = vadd.f32 %v1567, %v1679
    %v1681 = vpop.f32.mrb[0].mxu0
    %v1682 = vadd.f32 %v1569, %v1681
    %v1683 = vpop.f32.mrb[0].mxu0
    %v1684 = vadd.f32 %v1571, %v1683
    %v1685 = vpop.f32.mrb[0].mxu0
    %v1686 = vadd.f32 %v1573, %v1685
    %1687 = vmatprep.mubr.bf16.mxu0 %v479
    %1688 = vmatmul.mubr.bf16.gmra.mrb[0].mxu0 %v478
    %v1689 = vpop.f32.mrb[0].mxu0
    %v1690 = vadd.f32 %v1577, %v1689
    %v1691 = vpop.f32.mrb[0].mxu0
    %v1692 = vadd.f32 %v1579, %v1691
    %v1693 = vpop.f32.mrb[0].mxu0
    %v1694 = vadd.f32 %v1581, %v1693
    %v1695 = vpop.f32.mrb[0].mxu0
    %v1696 = vadd.f32 %v1583, %v1695
    %1697 = vmatprep.mubr.bf16.mxu0 %v483
    %1698 = vmatmul.mubr.bf16.gmra.mrb[0].mxu0 %v482
    %v1699 = vpop.f32.mrb[0].mxu0
    %v1700 = vadd.f32 %v1587, %v1699
    %v1701 = vpop.f32.mrb[0].mxu0
    %v1702 = vadd.f32 %v1589, %v1701
    %v1703 = vpop.f32.mrb[0].mxu0
    %v1704 = vadd.f32 %v1591, %v1703
    %v1705 = vpop.f32.mrb[0].mxu0
    %v1706 = vadd.f32 %v1593, %v1705
    %1707 = vmatprep.mubr.bf16.mxu0 %v487
    %1708 = vmatmul.mubr.bf16.gmra.mrb[0].mxu0 %v486
    %v1709 = vpop.f32.mrb[0].mxu0
    %v1710 = vadd.f32 %v1597, %v1709
    %v1711 = vpop.f32.mrb[0].mxu0
    %v1712 = vadd.f32 %v1599, %v1711
    %v1713 = vpop.f32.mrb[0].mxu0
    %v1714 = vadd.f32 %v1601, %v1713
    %v1715 = vpop.f32.mrb[0].mxu0
    %v1716 = vadd.f32 %v1603, %v1715
    %1717 = vmatprep.mubr.bf16.mxu0 %v491
    %1718 = vmatmul.mubr.bf16.gmra.mrb[0].mxu0 %v490
    %v1719 = vpop.f32.mrb[0].mxu0
    %v1720 = vadd.f32 %v1607, %v1719
    %v1721 = vpop.f32.mrb[0].mxu0
    %v1722 = vadd.f32 %v1609, %v1721
    %v1723 = vpop.f32.mrb[0].mxu0
    %v1724 = vadd.f32 %v1611, %v1723
    %v1725 = vpop.f32.mrb[0].mxu0
    %v1726 = vadd.f32 %v1613, %v1725
    %1727 = vmatprep.mubr.bf16.mxu0 %v495
    %1728 = vmatmul.mubr.bf16.gmra.mrb[0].mxu0 %v494
    %v1729 = vpop.f32.mrb[0].mxu0
    %v1730 = vadd.f32 %v1617, %v1729
    %v1731 = vpop.f32.mrb[0].mxu0
    %v1732 = vadd.f32 %v1619, %v1731
    %v1733 = vpop.f32.mrb[0].mxu0
    %v1734 = vadd.f32 %v1621, %v1733
    %v1735 = vpop.f32.mrb[0].mxu0
    %v1736 = vadd.f32 %v1623, %v1735
    %1737 = vdwg.mxu0
    %v1738 = vmax.f32 %v1434, 0.0
    %v1739 = vmax.f32 %v1436, 0.0
    %v1740 = vmax.f32 %v1660, 0.0
    %v1741 = vmax.f32 %v1662, 0.0
    %v1742 = vmax.f32 %v1438, 0.0
    %v1743 = vmax.f32 %v1440, 0.0
    %v1744 = vmax.f32 %v1664, 0.0
    %v1745 = vmax.f32 %v1666, 0.0
    %v1746 = vmax.f32 %v1444, 0.0
    %v1747 = vmax.f32 %v1446, 0.0
    %v1748 = vmax.f32 %v1670, 0.0
    %v1749 = vmax.f32 %v1672, 0.0
    %v1750 = vmax.f32 %v1448, 0.0
    %v1751 = vmax.f32 %v1450, 0.0
    %v1752 = vmax.f32 %v1674, 0.0
    %v1753 = vmax.f32 %v1676, 0.0
    %v1754 = vmax.f32 %v1454, 0.0
    %v1755 = vmax.f32 %v1456, 0.0
    %v1756 = vmax.f32 %v1680, 0.0
    %v1757 = vmax.f32 %v1682, 0.0
    %v1758 = vmax.f32 %v1458, 0.0
    %v1759 = vmax.f32 %v1460, 0.0
    %v1760 = vmax.f32 %v1684, 0.0
    %v1761 = vmax.f32 %v1686, 0.0
    %v1762 = vmax.f32 %v1464, 0.0
    %v1763 = vmax.f32 %v1466, 0.0
    %v1764 = vmax.f32 %v1690, 0.0
    %v1765 = vmax.f32 %v1692, 0.0
    %v1766 = vmax.f32 %v1468, 0.0
    %v1767 = vmax.f32 %v1470, 0.0
    %v1768 = vmax.f32 %v1694, 0.0
    %v1769 = vmax.f32 %v1696, 0.0
    %v1770 = vmax.f32 %v1474, 0.0
    %v1771 = vmax.f32 %v1476, 0.0
    %v1772 = vmax.f32 %v1700, 0.0
    %v1773 = vmax.f32 %v1702, 0.0
    %v1774 = vmax.f32 %v1478, 0.0
    %v1775 = vmax.f32 %v1480, 0.0
    %v1776 = vmax.f32 %v1704, 0.0
    %v1777 = vmax.f32 %v1706, 0.0
    %v1778 = vmax.f32 %v1484, 0.0
    %v1779 = vmax.f32 %v1486, 0.0
    %v1780 = vmax.f32 %v1710, 0.0
    %v1781 = vmax.f32 %v1712, 0.0
    %v1782 = vmax.f32 %v1488, 0.0
    %v1783 = vmax.f32 %v1490, 0.0
    %v1784 = vmax.f32 %v1714, 0.0
    %v1785 = vmax.f32 %v1716, 0.0
    %v1786 = vmax.f32 %v1494, 0.0
    %v1787 = vmax.f32 %v1496, 0.0
    %v1788 = vmax.f32 %v1720, 0.0
    %v1789 = vmax.f32 %v1722, 0.0
    %v1790 = vmax.f32 %v1498, 0.0
    %v1791 = vmax.f32 %v1500, 0.0
    %v1792 = vmax.f32 %v1724, 0.0
    %v1793 = vmax.f32 %v1726, 0.0
    %v1794 = vmax.f32 %v1504, 0.0
    %v1795 = vmax.f32 %v1506, 0.0
    %v1796 = vmax.f32 %v1730, 0.0
    %v1797 = vmax.f32 %v1732, 0.0
    %v1798 = vmax.f32 %v1508, 0.0
    %v1799 = vmax.f32 %v1510, 0.0
    %v1800 = vmax.f32 %v1734, 0.0
    %v1801 = vmax.f32 %v1736, 0.0
    %v1802 = vpack.c.bf16 %v1742, %v1738
    %v1803 = vpack.c.bf16 %v1743, %v1739
    %v1804 = vpack.c.bf16 %v1744, %v1740
    %v1805 = vpack.c.bf16 %v1745, %v1741
    %v1806 = vpack.c.bf16 %v1750, %v1746
    %v1807 = vpack.c.bf16 %v1751, %v1747
    %v1808 = vpack.c.bf16 %v1752, %v1748
    %v1809 = vpack.c.bf16 %v1753, %v1749
    %v1810 = vpack.c.bf16 %v1758, %v1754
    %v1811 = vpack.c.bf16 %v1759, %v1755
    %v1812 = vpack.c.bf16 %v1760, %v1756
    %v1813 = vpack.c.bf16 %v1761, %v1757
    %v1814 = vpack.c.bf16 %v1766, %v1762
    %v1815 = vpack.c.bf16 %v1767, %v1763
    %v1816 = vpack.c.bf16 %v1768, %v1764
    %v1817 = vpack.c.bf16 %v1769, %v1765
    %v1818 = vpack.c.bf16 %v1774, %v1770
    %v1819 = vpack.c.bf16 %v1775, %v1771
    %v1820 = vpack.c.bf16 %v1776, %v1772
    %v1821 = vpack.c.bf16 %v1777, %v1773
    %v1822 = vpack.c.bf16 %v1782, %v1778
    %v1823 = vpack.c.bf16 %v1783, %v1779
    %v1824 = vpack.c.bf16 %v1784, %v1780
    %v1825 = vpack.c.bf16 %v1785, %v1781
    %v1826 = vpack.c.bf16 %v1790, %v1786
    %v1827 = vpack.c.bf16 %v1791, %v1787
    %v1828 = vpack.c.bf16 %v1792, %v1788
    %v1829 = vpack.c.bf16 %v1793, %v1789
    %v1830 = vpack.c.bf16 %v1798, %v1794
    %v1831 = vpack.c.bf16 %v1799, %v1795
    %v1832 = vpack.c.bf16 %v1800, %v1796
    %v1833 = vpack.c.bf16 %v1801, %v1797
    %v1834 = vld [vmem:[#allocation4] sm:$0xf]
    %v1835 = vld [vmem:[#allocation4 + $0x4] sm:$0xf]
    %v1836 = vld [vmem:[#allocation4 + $0x8] sm:$0xf]
    %v1837 = vld [vmem:[#allocation4 + $0xc] sm:$0xf]
    %v1838 = vld [vmem:[#allocation4 + $0x10] sm:$0xf]
    %v1839 = vld [vmem:[#allocation4 + $0x14] sm:$0xf]
    %v1840 = vld [vmem:[#allocation4 + $0x18] sm:$0xf]
    %v1841 = vld [vmem:[#allocation4 + $0x1c] sm:$0xf]
    %v1842 = vld [vmem:[#allocation4 + $0x20] sm:$0xf]
    %v1843 = vld [vmem:[#allocation4 + $0x24] sm:$0xf]
    %v1844 = vld [vmem:[#allocation4 + $0x28] sm:$0xf]
    %v1845 = vld [vmem:[#allocation4 + $0x2c] sm:$0xf]
    %v1846 = vld [vmem:[#allocation4 + $0x30] sm:$0xf]
    %v1847 = vld [vmem:[#allocation4 + $0x34] sm:$0xf]
    %v1848 = vld [vmem:[#allocation4 + $0x38] sm:$0xf]
    %v1849 = vld [vmem:[#allocation4 + $0x3c] sm:$0xf]
    %v1850 = vld [vmem:[#allocation4 + $0x40] sm:$0xf]
    %v1851 = vld [vmem:[#allocation4 + $0x44] sm:$0xf]
    %v1852 = vld [vmem:[#allocation4 + $0x48] sm:$0xf]
    %v1853 = vld [vmem:[#allocation4 + $0x4c] sm:$0xf]
    %v1854 = vld [vmem:[#allocation4 + $0x50] sm:$0xf]
    %v1855 = vld [vmem:[#allocation4 + $0x54] sm:$0xf]
    %v1856 = vld [vmem:[#allocation4 + $0x58] sm:$0xf]
    %v1857 = vld [vmem:[#allocation4 + $0x5c] sm:$0xf]
    %v1858 = vld [vmem:[#allocation4 + $0x60] sm:$0xf]
    %v1859 = vld [vmem:[#allocation4 + $0x64] sm:$0xf]
    %v1860 = vld [vmem:[#allocation4 + $0x68] sm:$0xf]
    %v1861 = vld [vmem:[#allocation4 + $0x6c] sm:$0xf]
    %v1862 = vld [vmem:[#allocation4 + $0x70] sm:$0xf]
    %v1863 = vld [vmem:[#allocation4 + $0x74] sm:$0xf]
    %v1864 = vld [vmem:[#allocation4 + $0x78] sm:$0xf]
    %v1865 = vld [vmem:[#allocation4 + $0x7c] sm:$0xf]
    %v1866 = vld [vmem:[#allocation4 + $0x80] sm:$0xf]
    %v1867 = vld [vmem:[#allocation4 + $0x84] sm:$0xf]
    %v1868 = vld [vmem:[#allocation4 + $0x88] sm:$0xf]
    %v1869 = vld [vmem:[#allocation4 + $0x8c] sm:$0xf]
    %v1870 = vld [vmem:[#allocation4 + $0x90] sm:$0xf]
    %v1871 = vld [vmem:[#allocation4 + $0x94] sm:$0xf]
    %v1872 = vld [vmem:[#allocation4 + $0x98] sm:$0xf]
    %v1873 = vld [vmem:[#allocation4 + $0x9c] sm:$0xf]
    %v1874 = vld [vmem:[#allocation4 + $0xa0] sm:$0xf]
    %v1875 = vld [vmem:[#allocation4 + $0xa4] sm:$0xf]
    %v1876 = vld [vmem:[#allocation4 + $0xa8] sm:$0xf]
    %v1877 = vld [vmem:[#allocation4 + $0xac] sm:$0xf]
    %v1878 = vld [vmem:[#allocation4 + $0xb0] sm:$0xf]
    %v1879 = vld [vmem:[#allocation4 + $0xb4] sm:$0xf]
    %v1880 = vld [vmem:[#allocation4 + $0xb8] sm:$0xf]
    %v1881 = vld [vmem:[#allocation4 + $0xbc] sm:$0xf]
    %v1882 = vld [vmem:[#allocation4 + $0xc0] sm:$0xf]
    %v1883 = vld [vmem:[#allocation4 + $0xc4] sm:$0xf]
    %v1884 = vld [vmem:[#allocation4 + $0xc8] sm:$0xf]
    %v1885 = vld [vmem:[#allocation4 + $0xcc] sm:$0xf]
    %v1886 = vld [vmem:[#allocation4 + $0xd0] sm:$0xf]
    %v1887 = vld [vmem:[#allocation4 + $0xd4] sm:$0xf]
    %v1888 = vld [vmem:[#allocation4 + $0xd8] sm:$0xf]
    %v1889 = vld [vmem:[#allocation4 + $0xdc] sm:$0xf]
    %v1890 = vld [vmem:[#allocation4 + $0xe0] sm:$0xf]
    %v1891 = vld [vmem:[#allocation4 + $0xe4] sm:$0xf]
    %v1892 = vld [vmem:[#allocation4 + $0xe8] sm:$0xf]
    %v1893 = vld [vmem:[#allocation4 + $0xec] sm:$0xf]
    %v1894 = vld [vmem:[#allocation4 + $0xf0] sm:$0xf]
    %v1895 = vld [vmem:[#allocation4 + $0xf4] sm:$0xf]
    %v1896 = vld [vmem:[#allocation4 + $0xf8] sm:$0xf]
    %v1897 = vld [vmem:[#allocation4 + $0xfc] sm:$0xf]
    %v1898 = vld [vmem:[%s6] sm:$0x1]
    %v1900 = vlaneseq
    %v1901 = vshrl.u32 %v1900, 7
    %v1902 = vsub.s32 0, %v1901
    %v1903 = vrot.slane %v1898, %v1902
    %v1969 = vunpack.c.l.b16 %v1834
    %v1970 = vunpack.c.l.b16 %v1835
    %v1971 = vunpack.c.l.b16 %v1836
    %v1972 = vunpack.c.l.b16 %v1837
    %v1973 = vunpack.c.l.b16 %v1838
    %v1974 = vunpack.c.l.b16 %v1839
    %v1975 = vunpack.c.l.b16 %v1840
    %v1976 = vunpack.c.l.b16 %v1841
    %v1977 = vunpack.c.l.b16 %v1842
    %v1978 = vunpack.c.l.b16 %v1843
    %v1979 = vunpack.c.l.b16 %v1844
    %v1980 = vunpack.c.l.b16 %v1845
    %v1981 = vunpack.c.l.b16 %v1846
    %v1982 = vunpack.c.l.b16 %v1847
    %v1983 = vunpack.c.l.b16 %v1848
    %v1984 = vunpack.c.l.b16 %v1849
    %v1985 = vunpack.c.l.b16 %v1850
    %v1986 = vunpack.c.l.b16 %v1851
    %v1987 = vunpack.c.l.b16 %v1852
    %v1988 = vunpack.c.l.b16 %v1853
    %v1989 = vunpack.c.l.b16 %v1854
    %v1990 = vunpack.c.l.b16 %v1855
    %v1991 = vunpack.c.l.b16 %v1856
    %v1992 = vunpack.c.l.b16 %v1857
    %v1993 = vunpack.c.l.b16 %v1858
    %v1994 = vunpack.c.l.b16 %v1859
    %v1995 = vunpack.c.l.b16 %v1860
    %v1996 = vunpack.c.l.b16 %v1861
    %v1997 = vunpack.c.l.b16 %v1862
    %v1998 = vunpack.c.l.b16 %v1863
    %v1999 = vunpack.c.l.b16 %v1864
    %v2000 = vunpack.c.l.b16 %v1865
    %v2001 = vunpack.c.l.b16 %v1866
    %v2002 = vunpack.c.l.b16 %v1867
    %v2003 = vunpack.c.l.b16 %v1868
    %v2004 = vunpack.c.l.b16 %v1869
    %v2005 = vunpack.c.l.b16 %v1870
    %v2006 = vunpack.c.l.b16 %v1871
    %v2007 = vunpack.c.l.b16 %v1872
    %v2008 = vunpack.c.l.b16 %v1873
    %v2009 = vunpack.c.l.b16 %v1874
    %v2010 = vunpack.c.l.b16 %v1875
    %v2011 = vunpack.c.l.b16 %v1876
    %v2012 = vunpack.c.l.b16 %v1877
    %v2013 = vunpack.c.l.b16 %v1878
    %v2014 = vunpack.c.l.b16 %v1879
    %v2015 = vunpack.c.l.b16 %v1880
    %v2016 = vunpack.c.l.b16 %v1881
    %v2017 = vunpack.c.l.b16 %v1882
    %v2018 = vunpack.c.l.b16 %v1883
    %v2019 = vunpack.c.l.b16 %v1884
    %v2020 = vunpack.c.l.b16 %v1885
    %v2021 = vunpack.c.l.b16 %v1886
    %v2022 = vunpack.c.l.b16 %v1887
    %v2023 = vunpack.c.l.b16 %v1888
    %v2024 = vunpack.c.l.b16 %v1889
    %v2025 = vunpack.c.l.b16 %v1890
    %v2026 = vunpack.c.l.b16 %v1891
    %v2027 = vunpack.c.l.b16 %v1892
    %v2028 = vunpack.c.l.b16 %v1893
    %v2029 = vunpack.c.l.b16 %v1894
    %v2030 = vunpack.c.l.b16 %v1895
    %v2031 = vunpack.c.l.b16 %v1896
    %v2032 = vunpack.c.l.b16 %v1897
    %v2033 = vpack.c.b16 %v1970, %v1969
    %v2034 = vpack.c.b16 %v1972, %v1971
    %v2035 = vpack.c.b16 %v1974, %v1973
    %v2036 = vpack.c.b16 %v1976, %v1975
    %v2037 = vpack.c.b16 %v1978, %v1977
    %v2038 = vpack.c.b16 %v1980, %v1979
    %v2039 = vpack.c.b16 %v1982, %v1981
    %v2040 = vpack.c.b16 %v1984, %v1983
    %v2041 = vpack.c.b16 %v1986, %v1985
    %v2042 = vpack.c.b16 %v1988, %v1987
    %v2043 = vpack.c.b16 %v1990, %v1989
    %v2044 = vpack.c.b16 %v1992, %v1991
    %v2045 = vpack.c.b16 %v1994, %v1993
    %v2046 = vpack.c.b16 %v1996, %v1995
    %v2047 = vpack.c.b16 %v1998, %v1997
    %v2048 = vpack.c.b16 %v2000, %v1999
    %v2049 = vpack.c.b16 %v2002, %v2001
    %v2050 = vpack.c.b16 %v2004, %v2003
    %v2051 = vpack.c.b16 %v2006, %v2005
    %v2052 = vpack.c.b16 %v2008, %v2007
    %v2053 = vpack.c.b16 %v2010, %v2009
    %v2054 = vpack.c.b16 %v2012, %v2011
    %v2055 = vpack.c.b16 %v2014, %v2013
    %v2056 = vpack.c.b16 %v2016, %v2015
    %v2057 = vpack.c.b16 %v2018, %v2017
    %v2058 = vpack.c.b16 %v2020, %v2019
    %v2059 = vpack.c.b16 %v2022, %v2021
    %v2060 = vpack.c.b16 %v2024, %v2023
    %v2061 = vpack.c.b16 %v2026, %v2025
    %v2062 = vpack.c.b16 %v2028, %v2027
    %v2063 = vpack.c.b16 %v2030, %v2029
    %v2064 = vpack.c.b16 %v2032, %v2031
    %2097 = vmatprep.subr.bf16.mxu0 0
    %2098 = vmatpush1.bf16.msra.mxu0 %v2033
    %2099 = vmatprep.subr.bf16.mxu0 0
    %2100 = vmatpush1.bf16.msra.mxu0 %v2034
    %2101 = vmatprep.subr.bf16.mxu0 0
    %2102 = vmatpush1.bf16.msra.mxu0 %v2035
    %2103 = vmatprep.subr.bf16.mxu0 0
    %2104 = vmatpush1.bf16.msra.mxu0 %v2036
    %2105 = vmatprep.subr.bf16.mxu0 0
    %2106 = vmatpush1.bf16.msra.mxu0 %v2037
    %2107 = vmatprep.subr.bf16.mxu0 0
    %2108 = vmatpush1.bf16.msra.mxu0 %v2038
    %2109 = vmatprep.subr.bf16.mxu0 0
    %2110 = vmatpush1.bf16.msra.mxu0 %v2039
    %2111 = vmatprep.subr.bf16.mxu0 0
    %2112 = vmatpush1.bf16.msra.mxu0 %v2040
    %2113 = vmatprep.subr.bf16.mxu0 0
    %2114 = vmatpush1.bf16.msra.mxu0 %v2041
    %2115 = vmatprep.subr.bf16.mxu0 0
    %2116 = vmatpush1.bf16.msra.mxu0 %v2042
    %2117 = vmatprep.subr.bf16.mxu0 0
    %2118 = vmatpush1.bf16.msra.mxu0 %v2043
    %2119 = vmatprep.subr.bf16.mxu0 0
    %2120 = vmatpush1.bf16.msra.mxu0 %v2044
    %2121 = vmatprep.subr.bf16.mxu0 0
    %2122 = vmatpush1.bf16.msra.mxu0 %v2045
    %2123 = vmatprep.subr.bf16.mxu0 0
    %2124 = vmatpush1.bf16.msra.mxu0 %v2046
    %2125 = vmatprep.subr.bf16.mxu0 0
    %2126 = vmatpush1.bf16.msra.mxu0 %v2047
    %2127 = vmatprep.subr.bf16.mxu0 0
    %2128 = vmatpush1.bf16.msra.mxu0 %v2048
    %2129 = vmatprep.mubr.bf16.mxu0 %v1803
    %2130 = vmatmul.mubr.bf16.gmra.mrb[0].mxu0 %v1802
    %v2131 = vpop.f32.mrb[0].mxu0
    %v2132 = vadd.f32 %v1903, %v2131
    %v2133 = vpop.f32.mrb[0].mxu0
    %v2134 = vpop.f32.mrb[0].mxu0
    %v2135 = vadd.f32 %v1903, %v2134
    %v2136 = vpop.f32.mrb[0].mxu0
    %2137 = vmatprep.mubr.bf16.mxu0 %v1807
    %2138 = vmatmul.mubr.bf16.gmra.mrb[0].mxu0 %v1806
    %v2139 = vpop.f32.mrb[0].mxu0
    %v2140 = vadd.f32 %v1903, %v2139
    %v2141 = vpop.f32.mrb[0].mxu0
    %v2142 = vpop.f32.mrb[0].mxu0
    %v2143 = vadd.f32 %v1903, %v2142
    %v2144 = vpop.f32.mrb[0].mxu0
    %2145 = vmatprep.mubr.bf16.mxu0 %v1811
    %2146 = vmatmul.mubr.bf16.gmra.mrb[0].mxu0 %v1810
    %v2147 = vpop.f32.mrb[0].mxu0
    %v2148 = vadd.f32 %v1903, %v2147
    %v2149 = vpop.f32.mrb[0].mxu0
    %v2150 = vpop.f32.mrb[0].mxu0
    %v2151 = vadd.f32 %v1903, %v2150
    %v2152 = vpop.f32.mrb[0].mxu0
    %2153 = vmatprep.mubr.bf16.mxu0 %v1815
    %2154 = vmatmul.mubr.bf16.gmra.mrb[0].mxu0 %v1814
    %v2155 = vpop.f32.mrb[0].mxu0
    %v2156 = vadd.f32 %v1903, %v2155
    %v2157 = vpop.f32.mrb[0].mxu0
    %v2158 = vpop.f32.mrb[0].mxu0
    %v2159 = vadd.f32 %v1903, %v2158
    %v2160 = vpop.f32.mrb[0].mxu0
    %2161 = vmatprep.mubr.bf16.mxu0 %v1819
    %2162 = vmatmul.mubr.bf16.gmra.mrb[0].mxu0 %v1818
    %v2163 = vpop.f32.mrb[0].mxu0
    %v2164 = vadd.f32 %v1903, %v2163
    %v2165 = vpop.f32.mrb[0].mxu0
    %v2166 = vpop.f32.mrb[0].mxu0
    %v2167 = vadd.f32 %v1903, %v2166
    %v2168 = vpop.f32.mrb[0].mxu0
    %2169 = vmatprep.mubr.bf16.mxu0 %v1823
    %2170 = vmatmul.mubr.bf16.gmra.mrb[0].mxu0 %v1822
    %v2171 = vpop.f32.mrb[0].mxu0
    %v2172 = vadd.f32 %v1903, %v2171
    %v2173 = vpop.f32.mrb[0].mxu0
    %v2174 = vpop.f32.mrb[0].mxu0
    %v2175 = vadd.f32 %v1903, %v2174
    %v2176 = vpop.f32.mrb[0].mxu0
    %2177 = vmatprep.mubr.bf16.mxu0 %v1827
    %2178 = vmatmul.mubr.bf16.gmra.mrb[0].mxu0 %v1826
    %v2179 = vpop.f32.mrb[0].mxu0
    %v2180 = vadd.f32 %v1903, %v2179
    %v2181 = vpop.f32.mrb[0].mxu0
    %v2182 = vpop.f32.mrb[0].mxu0
    %v2183 = vadd.f32 %v1903, %v2182
    %v2184 = vpop.f32.mrb[0].mxu0
    %2185 = vmatprep.mubr.bf16.mxu0 %v1831
    %2186 = vmatmul.mubr.bf16.gmra.mrb[0].mxu0 %v1830
    %v2187 = vpop.f32.mrb[0].mxu0
    %v2188 = vadd.f32 %v1903, %v2187
    %v2189 = vpop.f32.mrb[0].mxu0
    %v2190 = vpop.f32.mrb[0].mxu0
    %v2191 = vadd.f32 %v1903, %v2190
    %v2192 = vpop.f32.mrb[0].mxu0
    %2193 = vdwg.mxu0
    %2194 = vmatprep.subr.bf16.mxu0 0
    %2195 = vmatpush1.bf16.msra.mxu0 %v2049
    %2196 = vmatprep.subr.bf16.mxu0 0
    %2197 = vmatpush1.bf16.msra.mxu0 %v2050
    %2198 = vmatprep.subr.bf16.mxu0 0
    %2199 = vmatpush1.bf16.msra.mxu0 %v2051
    %2200 = vmatprep.subr.bf16.mxu0 0
    %2201 = vmatpush1.bf16.msra.mxu0 %v2052
    %2202 = vmatprep.subr.bf16.mxu0 0
    %2203 = vmatpush1.bf16.msra.mxu0 %v2053
    %2204 = vmatprep.subr.bf16.mxu0 0
    %2205 = vmatpush1.bf16.msra.mxu0 %v2054
    %2206 = vmatprep.subr.bf16.mxu0 0
    %2207 = vmatpush1.bf16.msra.mxu0 %v2055
    %2208 = vmatprep.subr.bf16.mxu0 0
    %2209 = vmatpush1.bf16.msra.mxu0 %v2056
    %2210 = vmatprep.subr.bf16.mxu0 0
    %2211 = vmatpush1.bf16.msra.mxu0 %v2057
    %2212 = vmatprep.subr.bf16.mxu0 0
    %2213 = vmatpush1.bf16.msra.mxu0 %v2058
    %2214 = vmatprep.subr.bf16.mxu0 0
    %2215 = vmatpush1.bf16.msra.mxu0 %v2059
    %2216 = vmatprep.subr.bf16.mxu0 0
    %2217 = vmatpush1.bf16.msra.mxu0 %v2060
    %2218 = vmatprep.subr.bf16.mxu0 0
    %2219 = vmatpush1.bf16.msra.mxu0 %v2061
    %2220 = vmatprep.subr.bf16.mxu0 0
    %2221 = vmatpush1.bf16.msra.mxu0 %v2062
    %2222 = vmatprep.subr.bf16.mxu0 0
    %2223 = vmatpush1.bf16.msra.mxu0 %v2063
    %2224 = vmatprep.subr.bf16.mxu0 0
    %2225 = vmatpush1.bf16.msra.mxu0 %v2064
    %2226 = vmatprep.mubr.bf16.mxu0 %v1805
    %2227 = vmatmul.mubr.bf16.gmra.mrb[0].mxu0 %v1804
    %v2228 = vpop.f32.mrb[0].mxu0
    %v2229 = vadd.f32 %v2132, %v2228
    %v2230 = vpop.f32.mrb[0].mxu0
    %v2231 = vpop.f32.mrb[0].mxu0
    %v2232 = vadd.f32 %v2135, %v2231
    %v2233 = vpop.f32.mrb[0].mxu0
    %2234 = vmatprep.mubr.bf16.mxu0 %v1809
    %2235 = vmatmul.mubr.bf16.gmra.mrb[0].mxu0 %v1808
    %v2236 = vpop.f32.mrb[0].mxu0
    %v2237 = vadd.f32 %v2140, %v2236
    %v2238 = vpop.f32.mrb[0].mxu0
    %v2239 = vpop.f32.mrb[0].mxu0
    %v2240 = vadd.f32 %v2143, %v2239
    %v2241 = vpop.f32.mrb[0].mxu0
    %2242 = vmatprep.mubr.bf16.mxu0 %v1813
    %2243 = vmatmul.mubr.bf16.gmra.mrb[0].mxu0 %v1812
    %v2244 = vpop.f32.mrb[0].mxu0
    %v2245 = vadd.f32 %v2148, %v2244
    %v2246 = vpop.f32.mrb[0].mxu0
    %v2247 = vpop.f32.mrb[0].mxu0
    %v2248 = vadd.f32 %v2151, %v2247
    %v2249 = vpop.f32.mrb[0].mxu0
    %2250 = vmatprep.mubr.bf16.mxu0 %v1817
    %2251 = vmatmul.mubr.bf16.gmra.mrb[0].mxu0 %v1816
    %v2252 = vpop.f32.mrb[0].mxu0
    %v2253 = vadd.f32 %v2156, %v2252
    %v2254 = vpop.f32.mrb[0].mxu0
    %v2255 = vpop.f32.mrb[0].mxu0
    %v2256 = vadd.f32 %v2159, %v2255
    %v2257 = vpop.f32.mrb[0].mxu0
    %2258 = vmatprep.mubr.bf16.mxu0 %v1821
    %2259 = vmatmul.mubr.bf16.gmra.mrb[0].mxu0 %v1820
    %v2260 = vpop.f32.mrb[0].mxu0
    %v2261 = vadd.f32 %v2164, %v2260
    %v2262 = vpop.f32.mrb[0].mxu0
    %v2263 = vpop.f32.mrb[0].mxu0
    %v2264 = vadd.f32 %v2167, %v2263
    %v2265 = vpop.f32.mrb[0].mxu0
    %2266 = vmatprep.mubr.bf16.mxu0 %v1825
    %2267 = vmatmul.mubr.bf16.gmra.mrb[0].mxu0 %v1824
    %v2268 = vpop.f32.mrb[0].mxu0
    %v2269 = vadd.f32 %v2172, %v2268
    %v2270 = vpop.f32.mrb[0].mxu0
    %v2271 = vpop.f32.mrb[0].mxu0
    %v2272 = vadd.f32 %v2175, %v2271
    %v2273 = vpop.f32.mrb[0].mxu0
    %2274 = vmatprep.mubr.bf16.mxu0 %v1829
    %2275 = vmatmul.mubr.bf16.gmra.mrb[0].mxu0 %v1828
    %v2276 = vpop.f32.mrb[0].mxu0
    %v2277 = vadd.f32 %v2180, %v2276
    %v2278 = vpop.f32.mrb[0].mxu0
    %v2279 = vpop.f32.mrb[0].mxu0
    %v2280 = vadd.f32 %v2183, %v2279
    %v2281 = vpop.f32.mrb[0].mxu0
    %2282 = vmatprep.mubr.bf16.mxu0 %v1833
    %2283 = vmatmul.mubr.bf16.gmra.mrb[0].mxu0 %v1832
    %v2284 = vpop.f32.mrb[0].mxu0
    %v2285 = vadd.f32 %v2188, %v2284
    %v2286 = vpop.f32.mrb[0].mxu0
    %v2287 = vpop.f32.mrb[0].mxu0
    %v2288 = vadd.f32 %v2191, %v2287
    %v2289 = vpop.f32.mrb[0].mxu0
    %2290 = vdwg.mxu0
    %2291 = vmax.xlane.f32.xlu0 %v2229
    %v2292 = vpop.xlane.xlu0 %2291
    %2293 = vmax.xlane.f32.xlu0 %v2232
    %v2294 = vpop.xlane.xlu0 %2293
    %2295 = vmax.xlane.f32.xlu0 %v2237
    %v2296 = vpop.xlane.xlu0 %2295
    %2297 = vmax.xlane.f32.xlu0 %v2240
    %v2298 = vpop.xlane.xlu0 %2297
    %2299 = vmax.xlane.f32.xlu0 %v2245
    %v2300 = vpop.xlane.xlu0 %2299
    %2301 = vmax.xlane.f32.xlu0 %v2248
    %v2302 = vpop.xlane.xlu0 %2301
    %2303 = vmax.xlane.f32.xlu0 %v2253
    %v2304 = vpop.xlane.xlu0 %2303
    %2305 = vmax.xlane.f32.xlu0 %v2256
    %v2306 = vpop.xlane.xlu0 %2305
    %2307 = vmax.xlane.f32.xlu0 %v2261
    %v2308 = vpop.xlane.xlu0 %2307
    %2309 = vmax.xlane.f32.xlu0 %v2264
    %v2310 = vpop.xlane.xlu0 %2309
    %2311 = vmax.xlane.f32.xlu0 %v2269
    %v2312 = vpop.xlane.xlu0 %2311
    %2313 = vmax.xlane.f32.xlu0 %v2272
    %v2314 = vpop.xlane.xlu0 %2313
    %2315 = vmax.xlane.f32.xlu0 %v2277
    %v2316 = vpop.xlane.xlu0 %2315
    %2317 = vmax.xlane.f32.xlu0 %v2280
    %v2318 = vpop.xlane.xlu0 %2317
    %2319 = vmax.xlane.f32.xlu0 %v2285
    %v2320 = vpop.xlane.xlu0 %2319
    %2321 = vmax.xlane.f32.xlu0 %v2288
    %v2322 = vpop.xlane.xlu0 %2321
    %v2323 = vsub.f32 %v2229, %v2292
    %v2324 = vsub.f32 %v2232, %v2294
    %v2325 = vsub.f32 %v2237, %v2296
    %v2326 = vsub.f32 %v2240, %v2298
    %v2327 = vsub.f32 %v2245, %v2300
    %v2328 = vsub.f32 %v2248, %v2302
    %v2329 = vsub.f32 %v2253, %v2304
    %v2330 = vsub.f32 %v2256, %v2306
    %v2331 = vsub.f32 %v2261, %v2308
    %v2332 = vsub.f32 %v2264, %v2310
    %v2333 = vsub.f32 %v2269, %v2312
    %v2334 = vsub.f32 %v2272, %v2314
    %v2335 = vsub.f32 %v2277, %v2316
    %v2336 = vsub.f32 %v2280, %v2318
    %v2337 = vsub.f32 %v2285, %v2320
    %v2338 = vsub.f32 %v2288, %v2322
    %v2339 = vmul.f32 %v2323, 1.442695
    %v2340 = vpow.pop %v2339
    %v2341 = vmul.f32 %v2324, 1.442695
    %v2342 = vpow.pop %v2341
    %v2343 = vmul.f32 %v2325, 1.442695
    %v2344 = vpow.pop %v2343
    %v2345 = vmul.f32 %v2326, 1.442695
    %v2346 = vpow.pop %v2345
    %v2347 = vmul.f32 %v2327, 1.442695
    %v2348 = vpow.pop %v2347
    %v2349 = vmul.f32 %v2328, 1.442695
    %v2350 = vpow.pop %v2349
    %v2351 = vmul.f32 %v2329, 1.442695
    %v2352 = vpow.pop %v2351
    %v2353 = vmul.f32 %v2330, 1.442695
    %v2354 = vpow.pop %v2353
    %v2355 = vmul.f32 %v2331, 1.442695
    %v2356 = vpow.pop %v2355
    %v2357 = vmul.f32 %v2332, 1.442695
    %v2358 = vpow.pop %v2357
    %v2359 = vmul.f32 %v2333, 1.442695
    %v2360 = vpow.pop %v2359
    %v2361 = vmul.f32 %v2334, 1.442695
    %v2362 = vpow.pop %v2361
    %v2363 = vmul.f32 %v2335, 1.442695
    %v2364 = vpow.pop %v2363
    %v2365 = vmul.f32 %v2336, 1.442695
    %v2366 = vpow.pop %v2365
    %v2367 = vmul.f32 %v2337, 1.442695
    %v2368 = vpow.pop %v2367
    %v2369 = vmul.f32 %v2338, 1.442695
    %v2370 = vpow.pop %v2369
    %2371 = vadd.xlane.f32.xlu0 %v2340
    %v2372 = vpop.xlane.xlu0 %2371
    %2373 = vadd.xlane.f32.xlu0 %v2342
    %v2374 = vpop.xlane.xlu0 %2373
    %2375 = vadd.xlane.f32.xlu0 %v2344
    %v2376 = vpop.xlane.xlu0 %2375
    %2377 = vadd.xlane.f32.xlu0 %v2346
    %v2378 = vpop.xlane.xlu0 %2377
    %2379 = vadd.xlane.f32.xlu0 %v2348
    %v2380 = vpop.xlane.xlu0 %2379
    %2381 = vadd.xlane.f32.xlu0 %v2350
    %v2382 = vpop.xlane.xlu0 %2381
    %2383 = vadd.xlane.f32.xlu0 %v2352
    %v2384 = vpop.xlane.xlu0 %2383
    %2385 = vadd.xlane.f32.xlu0 %v2354
    %v2386 = vpop.xlane.xlu0 %2385
    %2387 = vadd.xlane.f32.xlu0 %v2356
    %v2388 = vpop.xlane.xlu0 %2387
    %2389 = vadd.xlane.f32.xlu0 %v2358
    %v2390 = vpop.xlane.xlu0 %2389
    %2391 = vadd.xlane.f32.xlu0 %v2360
    %v2392 = vpop.xlane.xlu0 %2391
    %2393 = vadd.xlane.f32.xlu0 %v2362
    %v2394 = vpop.xlane.xlu0 %2393
    %2395 = vadd.xlane.f32.xlu0 %v2364
    %v2396 = vpop.xlane.xlu0 %2395
    %2397 = vadd.xlane.f32.xlu0 %v2366
    %v2398 = vpop.xlane.xlu0 %2397
    %2399 = vadd.xlane.f32.xlu0 %v2368
    %v2400 = vpop.xlane.xlu0 %2399
    %2401 = vadd.xlane.f32.xlu0 %v2370
    %v2402 = vpop.xlane.xlu0 %2401
    %v2403 = vrcp.pop %v2372
    %v2404 = vmul.f32 %v2340, %v2403
    %v2405 = vrcp.pop %v2374
    %v2406 = vmul.f32 %v2342, %v2405
    %v2407 = vrcp.pop %v2376
    %v2408 = vmul.f32 %v2344, %v2407
    %v2409 = vrcp.pop %v2378
    %v2410 = vmul.f32 %v2346, %v2409
    %v2411 = vrcp.pop %v2380
    %v2412 = vmul.f32 %v2348, %v2411
    %v2413 = vrcp.pop %v2382
    %v2414 = vmul.f32 %v2350, %v2413
    %v2415 = vrcp.pop %v2384
    %v2416 = vmul.f32 %v2352, %v2415
    %v2417 = vrcp.pop %v2386
    %v2418 = vmul.f32 %v2354, %v2417
    %v2419 = vrcp.pop %v2388
    %v2420 = vmul.f32 %v2356, %v2419
    %v2421 = vrcp.pop %v2390
    %v2422 = vmul.f32 %v2358, %v2421
    %v2423 = vrcp.pop %v2392
    %v2424 = vmul.f32 %v2360, %v2423
    %v2425 = vrcp.pop %v2394
    %v2426 = vmul.f32 %v2362, %v2425
    %v2427 = vrcp.pop %v2396
    %v2428 = vmul.f32 %v2364, %v2427
    %v2429 = vrcp.pop %v2398
    %v2430 = vmul.f32 %v2366, %v2429
    %v2431 = vrcp.pop %v2400
    %v2432 = vmul.f32 %v2368, %v2431
    %v2433 = vrcp.pop %v2402
    %v2434 = vmul.f32 %v2370, %v2433
    %2435 = vst [vmem:[%s7] sm:$0xff] %v2404
    %2436 = vst [vmem:[%s7 + $0x8] sm:$0xff] %v2406
    %2437 = vst [vmem:[%s7 + $0x10] sm:$0xff] %v2408
    %2438 = vst [vmem:[%s7 + $0x18] sm:$0xff] %v2410
    %2439 = vst [vmem:[%s7 + $0x20] sm:$0xff] %v2412
    %2440 = vst [vmem:[%s7 + $0x28] sm:$0xff] %v2414
    %2441 = vst [vmem:[%s7 + $0x30] sm:$0xff] %v2416
    %2442 = vst [vmem:[%s7 + $0x38] sm:$0xff] %v2418
    %2443 = vst [vmem:[%s7 + $0x40] sm:$0xff] %v2420
    %2444 = vst [vmem:[%s7 + $0x48] sm:$0xff] %v2422
    %2445 = vst [vmem:[%s7 + $0x50] sm:$0xff] %v2424
    %2446 = vst [vmem:[%s7 + $0x58] sm:$0xff] %v2426
    %2447 = vst [vmem:[%s7 + $0x60] sm:$0xff] %v2428
    %2448 = vst [vmem:[%s7 + $0x68] sm:$0xff] %v2430
    %2449 = vst [vmem:[%s7 + $0x70] sm:$0xff] %v2432
    %2450 = vst [vmem:[%s7 + $0x78] sm:$0xff] %v2434
    // Predicated region
    $region38: #{unet_classifier_forward.1} parent=1 // pred_check
      _
    $region39: #{unet_classifier_forward.1} parent=1 // pred_check_branch
      %2452 = sbr.rel (0) target = $region41
    $region40: #{unet_classifier_forward.1} parent=1 // pred_region
      _
    $region41: #{unet_classifier_forward.1} parent=1 // pred_fallthru
      _
    // Predicated region
    $region42: #{unet_classifier_forward.1} parent=1 // pred_check
      _
    $region43: #{unet_classifier_forward.1} parent=1 // pred_check_branch
      %2454 = sbr.rel (0) target = $region45
    $region44: #{unet_classifier_forward.1} parent=1 // pred_region
      _
    $region45: #{unet_classifier_forward.1} parent=1 // pred_fallthru
      _
    %2455 = vsyncpa [#allocation3], 1
    %2456 = vsyncpa [#allocation5], 1

</llo_original>
